<compile_context>
chip_gen: v7x
topology: tpu7x:2x2x1
jax: 0.10.0
libtpu: 0.0.40
codegen_flags: <defaults>
</compile_context>

<pallas_src>
import math
import functools

import jax
import jax.numpy as jnp
from jax import lax
from jax.experimental import pallas as pl
from jax.experimental.pallas import tpu as pltpu


def _mha_kernel(num_heads, compute_dtype,
                q_ref, k_ref, v_ref,      # (Bb,Tq,Dq), (Bb,Tk,Dk), (Bb,Tk,Dv)
                vl_ref,                   # (Bb,1,1) int32 valid lengths
                wq_ref, wk_ref, wv_ref,   # (Dq,H), (Dk,H), (Dv,H); wq pre-scaled by 1/sqrt(dh)
                wo_ref,                   # (H,H)
                o_ref):                   # (Bb,Tq,H)
    Bb, Tq, Dq = q_ref.shape
    _, Tk, Dk = k_ref.shape
    Dv = v_ref.shape[-1]
    H = wq_ref.shape[-1]
    nh = num_heads
    dh = H // nh
    cd = compute_dtype

    # ---- Q/K/V projections: one full-width 2D MXU matmul each (K=D, N=H) ----
    q2 = q_ref[...].reshape(Bb * Tq, Dq).astype(cd)
    k2 = k_ref[...].reshape(Bb * Tk, Dk).astype(cd)
    v2 = v_ref[...].reshape(Bb * Tk, Dv).astype(cd)
    Q = jnp.dot(q2, wq_ref[...], preferred_element_type=cd).reshape(Bb, Tq, H)
    K = jnp.dot(k2, wk_ref[...], preferred_element_type=cd).reshape(Bb, Tk, H)
    V = jnp.dot(v2, wv_ref[...], preferred_element_type=cd).reshape(Bb, Tk, H)

    # ---- key-position mask, built once per batch block: (Bb,1,Tk) bool ----
    col = lax.broadcasted_iota(jnp.int32, (1, 1, Tk), 2)
    kmask = col < vl_ref[...]                                   # (Bb,1,Tk)
    neg = jnp.float32(-1000000.0)                               # masked_softmax fill value

    dn_qkT = (((2,), (2,)), ((0,), (0,)))   # (Bb,Tq,dh) x (Bb,Tk,dh) -> (Bb,Tq,Tk)
    dn_av = (((2,), (1,)), ((0,), (0,)))    # (Bb,Tq,Tk) x (Bb,Tk,dh) -> (Bb,Tq,dh)

    # ---- per-head scaled dot-product attention (static unroll over heads) ----
    ctx_heads = []
    for h in range(nh):
        sl = slice(h * dh, (h + 1) * dh)                        # static lane slice
        s = lax.dot_general(Q[:, :, sl], K[:, :, sl],
                            dimension_numbers=dn_qkT,
                            preferred_element_type=jnp.float32)  # (Bb,Tq,Tk) f32
        s = jnp.where(kmask, s, neg)
        m = jnp.max(s, axis=-1, keepdims=True)
        p = jnp.exp(s - m)
        den = jnp.sum(p, axis=-1, keepdims=True)
        r = pl.reciprocal(den, approx=True)
        r = r * (2.0 - den * r)               # one Newton step -> ~f32 accuracy
        attn = (p * r).astype(cd)
        ctx_h = lax.dot_general(attn, V[:, :, sl],
                                dimension_numbers=dn_av,
                                preferred_element_type=jnp.float32)  # (Bb,Tq,dh)
        ctx_heads.append(ctx_h.astype(cd))

    # Head-concat (== transpose_output) then a single output projection with K=H.
    ctx = jnp.concatenate(ctx_heads, axis=-1)                   # (Bb,Tq,H)
    out = jnp.dot(ctx.reshape(Bb * Tq, H), wo_ref[...],
                  preferred_element_type=jnp.float32)           # (Bb*Tq,H)
    o_ref[...] = out.reshape(Bb, Tq, H).astype(o_ref.dtype)


def multi_head_attention(queries, keys, values, valid_lens,
                         w_q, w_k, w_v, w_o, num_heads,
                         *, batch_block=None, compute_dtype=jnp.float32,
                         vmem_limit_bytes=32 * 1024 * 1024):
    """queries: (B,Tq,Dq); keys/values: (B,Tk,Dk/Dv); valid_lens: (B,) ints or None.
    w_*: (in_features, num_hiddens).  Returns (B, Tq, num_hiddens) float32."""
    B, Tq, Dq = queries.shape
    _, Tk, Dk = keys.shape
    Dv = values.shape[-1]
    H = w_q.shape[1]
    assert H % num_heads == 0
    dh = H // num_heads

    if batch_block is None:
        # Default to >= 2 grid steps when the batch splits evenly, so the
        # 'parallel' batch axis can shard across v7x's two TensorCores.
        # On 1-TC chips (v5e/v6e) pass batch_block=B to skip the extra step.
        batch_block = B // 2 if (B % 2 == 0 and B > 1) else B
    assert B % batch_block == 0
    Bb = batch_block

    cd = compute_dtype
    # Fold the 1/sqrt(dh) attention scale into W_q (free, once per call) and
    # hand the weights to the kernel already in the MXU compute dtype.
    wq_s = (w_q * (1.0 / math.sqrt(dh))).astype(cd)
    wk_c = w_k.astype(cd)
    wv_c = w_v.astype(cd)
    wo_c = w_o.astype(cd)

    if valid_lens is None:
        valid_lens = jnp.full((B,), Tk, dtype=jnp.int32)
    vl3 = valid_lens.astype(jnp.int32).reshape(B, 1, 1)

    kernel = functools.partial(_mha_kernel, num_heads, cd)

    grid = (B // Bb,)
    in_specs = [
        pl.BlockSpec((Bb, Tq, Dq), lambda i: (i, 0, 0)),
        pl.BlockSpec((Bb, Tk, Dk), lambda i: (i, 0, 0)),
        pl.BlockSpec((Bb, Tk, Dv), lambda i: (i, 0, 0)),
        pl.BlockSpec((Bb, 1, 1), lambda i: (i, 0, 0)),
        # Weights: constant index maps -> fetched once, resident across steps.
        pl.BlockSpec((Dq, H), lambda i: (0, 0)),
        pl.BlockSpec((Dk, H), lambda i: (0, 0)),
        pl.BlockSpec((Dv, H), lambda i: (0, 0)),
        pl.BlockSpec((H, H), lambda i: (0, 0)),
    ]
    out_specs = pl.BlockSpec((Bb, Tq, H), lambda i: (i, 0, 0))

    return pl.pallas_call(
        kernel,
        out_shape=jax.ShapeDtypeStruct((B, Tq, H), jnp.float32),
        grid=grid,
        in_specs=in_specs,
        out_specs=out_specs,
        compiler_params=pltpu.CompilerParams(
            dimension_semantics=("parallel",),
            vmem_limit_bytes=vmem_limit_bytes),
    )(queries, keys, values, vl3, wq_s, wk_c, wv_c, wo_c)


def _reference_mha(queries, keys, values, valid_lens,
                   w_q, w_k, w_v, w_o, num_heads):
    """Pure-JAX reference mirroring the PyTorch forward (dropout = identity)."""
    def t_qkv(x):
        B, T, H = x.shape
        x = x.reshape(B, T, num_heads, H // num_heads)
        x = jnp.transpose(x, (0, 2, 1, 3))
        return x.reshape(B * num_heads, T, H // num_heads)

    Q = t_qkv(queries @ w_q)
    K = t_qkv(keys @ w_k)
    V = t_qkv(values @ w_v)
    vl = jnp.repeat(valid_lens, num_heads, axis=0)                    # (B*nh,)

    d = Q.shape[-1]
    scores = jnp.einsum('bqd,bkd->bqk', Q, K) / math.sqrt(d)
    col = jnp.arange(scores.shape[-1])[None, None, :]
    mask = col < vl[:, None, None]
    scores = jnp.where(mask, scores, -1000000.0)
    attn = jax.nn.softmax(scores, axis=-1)
    out = jnp.einsum('bqk,bkd->bqd', attn, V)

    BH, Tq, dh = out.shape
    B = BH // num_heads
    out = out.reshape(B, num_heads, Tq, dh)
    out = jnp.transpose(out, (0, 2, 1, 3)).reshape(B, Tq, num_heads * dh)
    return out @ w_o


if __name__ == "__main__":
    # Small shapes consistent with the module.
    B, Tq, Tk = 2, 8, 8
    query_size = key_size = value_size = 32
    num_hiddens, num_heads = 32, 4

    key = jax.random.PRNGKey(0)
    ks = jax.random.split(key, 8)
    queries = jax.random.normal(ks[0], (B, Tq, query_size), jnp.float32)
    keys_in = jax.random.normal(ks[1], (B, Tk, key_size), jnp.float32)
    values = jax.random.normal(ks[2], (B, Tk, value_size), jnp.float32)
    valid_lens = jnp.array([3, 6], dtype=jnp.int32)

    # Deterministic weights, stored as (in_features, out_features).
    w_q = 0.05 * jax.random.normal(ks[3], (query_size, num_hiddens), jnp.float32)
    w_k = 0.05 * jax.random.normal(ks[4], (key_size, num_hiddens), jnp.float32)
    w_v = 0.05 * jax.random.normal(ks[5], (value_size, num_hiddens), jnp.float32)
    w_o = 0.05 * jax.random.normal(ks[6], (num_hiddens, num_hiddens), jnp.float32)

    out = multi_head_attention(queries, keys_in, values, valid_lens,
                               w_q, w_k, w_v, w_o, num_heads)
    out = jax.block_until_ready(out)

    ref = _reference_mha(queries, keys_in, values, valid_lens,
                         w_q, w_k, w_v, w_o, num_heads)
    assert out.shape == (B, Tq, num_hiddens)
    assert jnp.allclose(out, ref, atol=1e-4, rtol=1e-4)

    print("KERNEL_OK")
</pallas_src>

<mosaic_0001>
module attributes {stable_mosaic.version = 11 : i64} {
  func.func @_mha_kernel(%arg0: i32, %arg1: memref<1x8x32xf32, #tpu.memory_space<vmem>>, %arg2: memref<1x8x32xf32, #tpu.memory_space<vmem>>, %arg3: memref<1x8x32xf32, #tpu.memory_space<vmem>>, %arg4: memref<1x1x1xi32, #tpu.memory_space<vmem>>, %arg5: memref<32x32xf32, #tpu.memory_space<vmem>>, %arg6: memref<32x32xf32, #tpu.memory_space<vmem>>, %arg7: memref<32x32xf32, #tpu.memory_space<vmem>>, %arg8: memref<32x32xf32, #tpu.memory_space<vmem>>, %arg9: memref<1x8x32xf32, #tpu.memory_space<vmem>>) attributes {dimension_semantics = [#tpu.dimension_semantics<parallel>], iteration_bounds = array<i64: 2>, scalar_prefetch = 0 : i64, scratch_operands = 0 : i64, tpu.core_type = #tpu.core_type<tc>, window_params = [{transform_indices = @transform_0, window_bounds = array<i64: 1, 8, 32>}, {transform_indices = @transform_1, window_bounds = array<i64: 1, 8, 32>}, {transform_indices = @transform_2, window_bounds = array<i64: 1, 8, 32>}, {transform_indices = @transform_3, window_bounds = array<i64: 1, 1, 1>}, {pipeline_mode = #tpu.pipeline_mode<synchronous>, transform_indices = @transform_4, window_bounds = array<i64: 32, 32>}, {pipeline_mode = #tpu.pipeline_mode<synchronous>, transform_indices = @transform_5, window_bounds = array<i64: 32, 32>}, {pipeline_mode = #tpu.pipeline_mode<synchronous>, transform_indices = @transform_6, window_bounds = array<i64: 32, 32>}, {pipeline_mode = #tpu.pipeline_mode<synchronous>, transform_indices = @transform_7, window_bounds = array<i64: 32, 32>}, {transform_indices = @transform_8, window_bounds = array<i64: 1, 8, 32>}]} {
    %c0 = arith.constant 0 : index
    %c0_0 = arith.constant 0 : index
    %c0_1 = arith.constant 0 : index
    %0 = vector.load %arg1[%c0, %c0_0, %c0_1] : memref<1x8x32xf32, #tpu.memory_space<vmem>>, vector<1x8x32xf32>
    %1 = vector.shape_cast %0 : vector<1x8x32xf32> to vector<8x32xf32>
    %c0_2 = arith.constant 0 : index
    %c0_3 = arith.constant 0 : index
    %c0_4 = arith.constant 0 : index
    %2 = vector.load %arg2[%c0_2, %c0_3, %c0_4] : memref<1x8x32xf32, #tpu.memory_space<vmem>>, vector<1x8x32xf32>
    %3 = vector.shape_cast %2 : vector<1x8x32xf32> to vector<8x32xf32>
    %c0_5 = arith.constant 0 : index
    %c0_6 = arith.constant 0 : index
    %c0_7 = arith.constant 0 : index
    %4 = vector.load %arg3[%c0_5, %c0_6, %c0_7] : memref<1x8x32xf32, #tpu.memory_space<vmem>>, vector<1x8x32xf32>
    %5 = vector.shape_cast %4 : vector<1x8x32xf32> to vector<8x32xf32>
    %c0_8 = arith.constant 0 : index
    %c0_9 = arith.constant 0 : index
    %6 = vector.load %arg5[%c0_8, %c0_9] : memref<32x32xf32, #tpu.memory_space<vmem>>, vector<32x32xf32>
    %cst = arith.constant dense<0.000000e+00> : vector<8x32xf32>
    %7 = tpu.matmul %1, %6, %cst {dimension_numbers = #tpu.dot_dimension_numbers<[1], [0], [0], [1], [0, 0, 1, 1], [], []>} : vector<8x32xf32>, vector<32x32xf32>, vector<8x32xf32> -> vector<8x32xf32>
    %8 = vector.shape_cast %7 : vector<8x32xf32> to vector<1x8x32xf32>
    %c0_10 = arith.constant 0 : index
    %c0_11 = arith.constant 0 : index
    %9 = vector.load %arg6[%c0_10, %c0_11] : memref<32x32xf32, #tpu.memory_space<vmem>>, vector<32x32xf32>
    %cst_12 = arith.constant dense<0.000000e+00> : vector<8x32xf32>
    %10 = tpu.matmul %3, %9, %cst_12 {dimension_numbers = #tpu.dot_dimension_numbers<[1], [0], [0], [1], [0, 0, 1, 1], [], []>} : vector<8x32xf32>, vector<32x32xf32>, vector<8x32xf32> -> vector<8x32xf32>
    %11 = vector.shape_cast %10 : vector<8x32xf32> to vector<1x8x32xf32>
    %c0_13 = arith.constant 0 : index
    %c0_14 = arith.constant 0 : index
    %12 = vector.load %arg7[%c0_13, %c0_14] : memref<32x32xf32, #tpu.memory_space<vmem>>, vector<32x32xf32>
    %cst_15 = arith.constant dense<0.000000e+00> : vector<8x32xf32>
    %13 = tpu.matmul %5, %12, %cst_15 {dimension_numbers = #tpu.dot_dimension_numbers<[1], [0], [0], [1], [0, 0, 1, 1], [], []>} : vector<8x32xf32>, vector<32x32xf32>, vector<8x32xf32> -> vector<8x32xf32>
    %14 = vector.shape_cast %13 : vector<8x32xf32> to vector<1x8x32xf32>
    %15 = tpu.iota {dimensions = array<i32: 2>} : vector<1x1x8xi32>
    %c0_16 = arith.constant 0 : index
    %c0_17 = arith.constant 0 : index
    %c0_18 = arith.constant 0 : index
    %16 = vector.load %arg4[%c0_16, %c0_17, %c0_18] : memref<1x1x1xi32, #tpu.memory_space<vmem>>, vector<1x1x1xi32>
    %17 = vector.broadcast %16 : vector<1x1x1xi32> to vector<1x1x8xi32>
    %18 = arith.cmpi slt, %15, %17 : vector<1x1x8xi32>
    %19 = vector.extract_strided_slice %8 {offsets = [0, 0, 0], sizes = [1, 8, 8], strides = [1, 1, 1]} : vector<1x8x32xf32> to vector<1x8x8xf32>
    %20 = vector.extract_strided_slice %11 {offsets = [0, 0, 0], sizes = [1, 8, 8], strides = [1, 1, 1]} : vector<1x8x32xf32> to vector<1x8x8xf32>
    %cst_19 = arith.constant dense<0.000000e+00> : vector<1x8x8xf32>
    %21 = tpu.matmul %19, %20, %cst_19 {dimension_numbers = #tpu.dot_dimension_numbers<[2], [2], [1], [1], [0, 0, 0, 1, 1, 1], [0], [0]>} : vector<1x8x8xf32>, vector<1x8x8xf32>, vector<1x8x8xf32> -> vector<1x8x8xf32>
    %cst_20 = arith.constant -1.000000e+06 : f32
    %22 = vector.shape_cast %18 : vector<1x1x8xi1> to vector<1x1x8xi1>
    %23 = vector.broadcast %22 : vector<1x1x8xi1> to vector<1x8x8xi1>
    %24 = vector.broadcast %cst_20 : f32 to vector<1x8x8xf32>
    %25 = arith.select %23, %21, %24 : vector<1x8x8xi1>, vector<1x8x8xf32>
    %cst_21 = arith.constant dense<0xFF800000> : vector<1x8xf32>
    %26 = vector.multi_reduction <maximumf>, %25, %cst_21 [2] : vector<1x8x8xf32> to vector<1x8xf32>
    %27 = vector.shape_cast %26 : vector<1x8xf32> to vector<1x8x1xf32>
    %28 = vector.broadcast %27 : vector<1x8x1xf32> to vector<1x8x8xf32>
    %29 = arith.subf %25, %28 : vector<1x8x8xf32>
    %30 = math.exp %29 : vector<1x8x8xf32>
    %cst_22 = arith.constant dense<0.000000e+00> : vector<1x8xf32>
    %31 = vector.multi_reduction <add>, %30, %cst_22 [2] : vector<1x8x8xf32> to vector<1x8xf32>
    %32 = vector.shape_cast %31 : vector<1x8xf32> to vector<1x8x1xf32>
    %33 = tpu.reciprocal %32 {approx = true} : vector<1x8x1xf32> -> vector<1x8x1xf32>
    %34 = arith.mulf %32, %33 : vector<1x8x1xf32>
    %cst_23 = arith.constant 2.000000e+00 : f32
    %35 = vector.broadcast %cst_23 : f32 to vector<1x8x1xf32>
    %36 = arith.subf %35, %34 : vector<1x8x1xf32>
    %37 = arith.mulf %33, %36 : vector<1x8x1xf32>
    %38 = vector.broadcast %37 : vector<1x8x1xf32> to vector<1x8x8xf32>
    %39 = arith.mulf %30, %38 : vector<1x8x8xf32>
    %40 = vector.extract_strided_slice %14 {offsets = [0, 0, 0], sizes = [1, 8, 8], strides = [1, 1, 1]} : vector<1x8x32xf32> to vector<1x8x8xf32>
    %cst_24 = arith.constant dense<0.000000e+00> : vector<1x8x8xf32>
    %41 = tpu.matmul %39, %40, %cst_24 {dimension_numbers = #tpu.dot_dimension_numbers<[2], [1], [1], [2], [0, 0, 0, 1, 1, 2], [0], [0]>} : vector<1x8x8xf32>, vector<1x8x8xf32>, vector<1x8x8xf32> -> vector<1x8x8xf32>
    %42 = vector.extract_strided_slice %8 {offsets = [0, 0, 8], sizes = [1, 8, 8], strides = [1, 1, 1]} : vector<1x8x32xf32> to vector<1x8x8xf32>
    %43 = vector.extract_strided_slice %11 {offsets = [0, 0, 8], sizes = [1, 8, 8], strides = [1, 1, 1]} : vector<1x8x32xf32> to vector<1x8x8xf32>
    %cst_25 = arith.constant dense<0.000000e+00> : vector<1x8x8xf32>
    %44 = tpu.matmul %42, %43, %cst_25 {dimension_numbers = #tpu.dot_dimension_numbers<[2], [2], [1], [1], [0, 0, 0, 1, 1, 1], [0], [0]>} : vector<1x8x8xf32>, vector<1x8x8xf32>, vector<1x8x8xf32> -> vector<1x8x8xf32>
    %cst_26 = arith.constant -1.000000e+06 : f32
    %45 = vector.shape_cast %18 : vector<1x1x8xi1> to vector<1x1x8xi1>
    %46 = vector.broadcast %45 : vector<1x1x8xi1> to vector<1x8x8xi1>
    %47 = vector.broadcast %cst_26 : f32 to vector<1x8x8xf32>
    %48 = arith.select %46, %44, %47 : vector<1x8x8xi1>, vector<1x8x8xf32>
    %cst_27 = arith.constant dense<0xFF800000> : vector<1x8xf32>
    %49 = vector.multi_reduction <maximumf>, %48, %cst_27 [2] : vector<1x8x8xf32> to vector<1x8xf32>
    %50 = vector.shape_cast %49 : vector<1x8xf32> to vector<1x8x1xf32>
    %51 = vector.broadcast %50 : vector<1x8x1xf32> to vector<1x8x8xf32>
    %52 = arith.subf %48, %51 : vector<1x8x8xf32>
    %53 = math.exp %52 : vector<1x8x8xf32>
    %cst_28 = arith.constant dense<0.000000e+00> : vector<1x8xf32>
    %54 = vector.multi_reduction <add>, %53, %cst_28 [2] : vector<1x8x8xf32> to vector<1x8xf32>
    %55 = vector.shape_cast %54 : vector<1x8xf32> to vector<1x8x1xf32>
    %56 = tpu.reciprocal %55 {approx = true} : vector<1x8x1xf32> -> vector<1x8x1xf32>
    %57 = arith.mulf %55, %56 : vector<1x8x1xf32>
    %cst_29 = arith.constant 2.000000e+00 : f32
    %58 = vector.broadcast %cst_29 : f32 to vector<1x8x1xf32>
    %59 = arith.subf %58, %57 : vector<1x8x1xf32>
    %60 = arith.mulf %56, %59 : vector<1x8x1xf32>
    %61 = vector.broadcast %60 : vector<1x8x1xf32> to vector<1x8x8xf32>
    %62 = arith.mulf %53, %61 : vector<1x8x8xf32>
    %63 = vector.extract_strided_slice %14 {offsets = [0, 0, 8], sizes = [1, 8, 8], strides = [1, 1, 1]} : vector<1x8x32xf32> to vector<1x8x8xf32>
    %cst_30 = arith.constant dense<0.000000e+00> : vector<1x8x8xf32>
    %64 = tpu.matmul %62, %63, %cst_30 {dimension_numbers = #tpu.dot_dimension_numbers<[2], [1], [1], [2], [0, 0, 0, 1, 1, 2], [0], [0]>} : vector<1x8x8xf32>, vector<1x8x8xf32>, vector<1x8x8xf32> -> vector<1x8x8xf32>
    %65 = vector.extract_strided_slice %8 {offsets = [0, 0, 16], sizes = [1, 8, 8], strides = [1, 1, 1]} : vector<1x8x32xf32> to vector<1x8x8xf32>
    %66 = vector.extract_strided_slice %11 {offsets = [0, 0, 16], sizes = [1, 8, 8], strides = [1, 1, 1]} : vector<1x8x32xf32> to vector<1x8x8xf32>
    %cst_31 = arith.constant dense<0.000000e+00> : vector<1x8x8xf32>
    %67 = tpu.matmul %65, %66, %cst_31 {dimension_numbers = #tpu.dot_dimension_numbers<[2], [2], [1], [1], [0, 0, 0, 1, 1, 1], [0], [0]>} : vector<1x8x8xf32>, vector<1x8x8xf32>, vector<1x8x8xf32> -> vector<1x8x8xf32>
    %cst_32 = arith.constant -1.000000e+06 : f32
    %68 = vector.shape_cast %18 : vector<1x1x8xi1> to vector<1x1x8xi1>
    %69 = vector.broadcast %68 : vector<1x1x8xi1> to vector<1x8x8xi1>
    %70 = vector.broadcast %cst_32 : f32 to vector<1x8x8xf32>
    %71 = arith.select %69, %67, %70 : vector<1x8x8xi1>, vector<1x8x8xf32>
    %cst_33 = arith.constant dense<0xFF800000> : vector<1x8xf32>
    %72 = vector.multi_reduction <maximumf>, %71, %cst_33 [2] : vector<1x8x8xf32> to vector<1x8xf32>
    %73 = vector.shape_cast %72 : vector<1x8xf32> to vector<1x8x1xf32>
    %74 = vector.broadcast %73 : vector<1x8x1xf32> to vector<1x8x8xf32>
    %75 = arith.subf %71, %74 : vector<1x8x8xf32>
    %76 = math.exp %75 : vector<1x8x8xf32>
    %cst_34 = arith.constant dense<0.000000e+00> : vector<1x8xf32>
    %77 = vector.multi_reduction <add>, %76, %cst_34 [2] : vector<1x8x8xf32> to vector<1x8xf32>
    %78 = vector.shape_cast %77 : vector<1x8xf32> to vector<1x8x1xf32>
    %79 = tpu.reciprocal %78 {approx = true} : vector<1x8x1xf32> -> vector<1x8x1xf32>
    %80 = arith.mulf %78, %79 : vector<1x8x1xf32>
    %cst_35 = arith.constant 2.000000e+00 : f32
    %81 = vector.broadcast %cst_35 : f32 to vector<1x8x1xf32>
    %82 = arith.subf %81, %80 : vector<1x8x1xf32>
    %83 = arith.mulf %79, %82 : vector<1x8x1xf32>
    %84 = vector.broadcast %83 : vector<1x8x1xf32> to vector<1x8x8xf32>
    %85 = arith.mulf %76, %84 : vector<1x8x8xf32>
    %86 = vector.extract_strided_slice %14 {offsets = [0, 0, 16], sizes = [1, 8, 8], strides = [1, 1, 1]} : vector<1x8x32xf32> to vector<1x8x8xf32>
    %cst_36 = arith.constant dense<0.000000e+00> : vector<1x8x8xf32>
    %87 = tpu.matmul %85, %86, %cst_36 {dimension_numbers = #tpu.dot_dimension_numbers<[2], [1], [1], [2], [0, 0, 0, 1, 1, 2], [0], [0]>} : vector<1x8x8xf32>, vector<1x8x8xf32>, vector<1x8x8xf32> -> vector<1x8x8xf32>
    %88 = vector.extract_strided_slice %8 {offsets = [0, 0, 24], sizes = [1, 8, 8], strides = [1, 1, 1]} : vector<1x8x32xf32> to vector<1x8x8xf32>
    %89 = vector.extract_strided_slice %11 {offsets = [0, 0, 24], sizes = [1, 8, 8], strides = [1, 1, 1]} : vector<1x8x32xf32> to vector<1x8x8xf32>
    %cst_37 = arith.constant dense<0.000000e+00> : vector<1x8x8xf32>
    %90 = tpu.matmul %88, %89, %cst_37 {dimension_numbers = #tpu.dot_dimension_numbers<[2], [2], [1], [1], [0, 0, 0, 1, 1, 1], [0], [0]>} : vector<1x8x8xf32>, vector<1x8x8xf32>, vector<1x8x8xf32> -> vector<1x8x8xf32>
    %cst_38 = arith.constant -1.000000e+06 : f32
    %91 = vector.shape_cast %18 : vector<1x1x8xi1> to vector<1x1x8xi1>
    %92 = vector.broadcast %91 : vector<1x1x8xi1> to vector<1x8x8xi1>
    %93 = vector.broadcast %cst_38 : f32 to vector<1x8x8xf32>
    %94 = arith.select %92, %90, %93 : vector<1x8x8xi1>, vector<1x8x8xf32>
    %cst_39 = arith.constant dense<0xFF800000> : vector<1x8xf32>
    %95 = vector.multi_reduction <maximumf>, %94, %cst_39 [2] : vector<1x8x8xf32> to vector<1x8xf32>
    %96 = vector.shape_cast %95 : vector<1x8xf32> to vector<1x8x1xf32>
    %97 = vector.broadcast %96 : vector<1x8x1xf32> to vector<1x8x8xf32>
    %98 = arith.subf %94, %97 : vector<1x8x8xf32>
    %99 = math.exp %98 : vector<1x8x8xf32>
    %cst_40 = arith.constant dense<0.000000e+00> : vector<1x8xf32>
    %100 = vector.multi_reduction <add>, %99, %cst_40 [2] : vector<1x8x8xf32> to vector<1x8xf32>
    %101 = vector.shape_cast %100 : vector<1x8xf32> to vector<1x8x1xf32>
    %102 = tpu.reciprocal %101 {approx = true} : vector<1x8x1xf32> -> vector<1x8x1xf32>
    %103 = arith.mulf %101, %102 : vector<1x8x1xf32>
    %cst_41 = arith.constant 2.000000e+00 : f32
    %104 = vector.broadcast %cst_41 : f32 to vector<1x8x1xf32>
    %105 = arith.subf %104, %103 : vector<1x8x1xf32>
    %106 = arith.mulf %102, %105 : vector<1x8x1xf32>
    %107 = vector.broadcast %106 : vector<1x8x1xf32> to vector<1x8x8xf32>
    %108 = arith.mulf %99, %107 : vector<1x8x8xf32>
    %109 = vector.extract_strided_slice %14 {offsets = [0, 0, 24], sizes = [1, 8, 8], strides = [1, 1, 1]} : vector<1x8x32xf32> to vector<1x8x8xf32>
    %cst_42 = arith.constant dense<0.000000e+00> : vector<1x8x8xf32>
    %110 = tpu.matmul %108, %109, %cst_42 {dimension_numbers = #tpu.dot_dimension_numbers<[2], [1], [1], [2], [0, 0, 0, 1, 1, 2], [0], [0]>} : vector<1x8x8xf32>, vector<1x8x8xf32>, vector<1x8x8xf32> -> vector<1x8x8xf32>
    %111 = tpu.concatenate %41, %64, %87, %110 in 2 : vector<1x8x8xf32>, vector<1x8x8xf32>, vector<1x8x8xf32>, vector<1x8x8xf32> -> vector<1x8x32xf32>
    %112 = vector.shape_cast %111 : vector<1x8x32xf32> to vector<8x32xf32>
    %c0_43 = arith.constant 0 : index
    %c0_44 = arith.constant 0 : index
    %113 = vector.load %arg8[%c0_43, %c0_44] : memref<32x32xf32, #tpu.memory_space<vmem>>, vector<32x32xf32>
    %cst_45 = arith.constant dense<0.000000e+00> : vector<8x32xf32>
    %114 = tpu.matmul %112, %113, %cst_45 {dimension_numbers = #tpu.dot_dimension_numbers<[1], [0], [0], [1], [0, 0, 1, 1], [], []>} : vector<8x32xf32>, vector<32x32xf32>, vector<8x32xf32> -> vector<8x32xf32>
    %115 = vector.shape_cast %114 : vector<8x32xf32> to vector<1x8x32xf32>
    %c0_46 = arith.constant 0 : index
    %c0_47 = arith.constant 0 : index
    %c0_48 = arith.constant 0 : index
    %116 = vector.load %arg9[%c0_46, %c0_47, %c0_48] : memref<1x8x32xf32, #tpu.memory_space<vmem>>, vector<1x8x32xf32>
    tpu.vector_store %arg9[%c0_46, %c0_47, %c0_48], %115 {strides = array<i32>} : memref<1x8x32xf32, #tpu.memory_space<vmem>>, vector<1x8x32xf32>,
    return
  }
  func.func @transform_0(%arg0: i32) -> (i32, i32, i32) {
    %c0_i32 = arith.constant 0 : i32
    %c0_i32_0 = arith.constant 0 : i32
    %c0_i32_1 = arith.constant 0 : i32
    return %arg0, %c0_i32, %c0_i32_0 : i32, i32, i32
  }
  func.func @transform_1(%arg0: i32) -> (i32, i32, i32) {
    %c0_i32 = arith.constant 0 : i32
    %c0_i32_0 = arith.constant 0 : i32
    %c0_i32_1 = arith.constant 0 : i32
    return %arg0, %c0_i32, %c0_i32_0 : i32, i32, i32
  }
  func.func @transform_2(%arg0: i32) -> (i32, i32, i32) {
    %c0_i32 = arith.constant 0 : i32
    %c0_i32_0 = arith.constant 0 : i32
    %c0_i32_1 = arith.constant 0 : i32
    return %arg0, %c0_i32, %c0_i32_0 : i32, i32, i32
  }
  func.func @transform_3(%arg0: i32) -> (i32, i32, i32) {
    %c0_i32 = arith.constant 0 : i32
    %c0_i32_0 = arith.constant 0 : i32
    %c0_i32_1 = arith.constant 0 : i32
    return %arg0, %c0_i32, %c0_i32_0 : i32, i32, i32
  }
  func.func @transform_4(%arg0: i32) -> (i32, i32) {
    %c0_i32 = arith.constant 0 : i32
    %c0_i32_0 = arith.constant 0 : i32
    %c0_i32_1 = arith.constant 0 : i32
    return %c0_i32, %c0_i32_0 : i32, i32
  }
  func.func @transform_5(%arg0: i32) -> (i32, i32) {
    %c0_i32 = arith.constant 0 : i32
    %c0_i32_0 = arith.constant 0 : i32
    %c0_i32_1 = arith.constant 0 : i32
    return %c0_i32, %c0_i32_0 : i32, i32
  }
  func.func @transform_6(%arg0: i32) -> (i32, i32) {
    %c0_i32 = arith.constant 0 : i32
    %c0_i32_0 = arith.constant 0 : i32
    %c0_i32_1 = arith.constant 0 : i32
    return %c0_i32, %c0_i32_0 : i32, i32
  }
  func.func @transform_7(%arg0: i32) -> (i32, i32) {
    %c0_i32 = arith.constant 0 : i32
    %c0_i32_0 = arith.constant 0 : i32
    %c0_i32_1 = arith.constant 0 : i32
    return %c0_i32, %c0_i32_0 : i32, i32
  }
  func.func @transform_8(%arg0: i32) -> (i32, i32, i32) {
    %c0_i32 = arith.constant 0 : i32
    %c0_i32_0 = arith.constant 0 : i32
    %c0_i32_1 = arith.constant 0 : i32
    return %arg0, %c0_i32, %c0_i32_0 : i32, i32, i32
  }
}

</mosaic_0001>

<llo_original>
// kernel: tpu_custom_call.1
$region0: #{tpu_custom_call.1}
  #allocation0 [shape = 'u32[]', space=smem, size = 0x4, offset = 0x4, fixed_abs, tag = 'smem constant byte address 0x4 - core index']
  #allocation1 [shape = 'u32[144,128]{1,0:T(1,128)}', space=vmem, size = 0x12000, scoped, tag = 'internal scratch']
  %s0 = inlined_call_operand.hbm [shape: f32[2,8,32], index: 0, kind: input, shape index: {}]
  %s1 = inlined_call_operand.hbm [shape: f32[2,8,32], index: 1, kind: input, shape index: {}]
  %s2 = inlined_call_operand.hbm [shape: f32[2,8,32], index: 2, kind: input, shape index: {}]
  %s3 = inlined_call_operand.vmem [shape: s32[2,1,1], index: 3, kind: input, shape index: {}]
  %s4 = inlined_call_operand.hbm [shape: f32[32,32], index: 4, kind: input, shape index: {}]
  %s5 = inlined_call_operand.hbm [shape: f32[32,32], index: 5, kind: input, shape index: {}]
  %s6 = inlined_call_operand.hbm [shape: f32[32,32], index: 6, kind: input, shape index: {}]
  %s7 = inlined_call_operand.hbm [shape: f32[32,32], index: 7, kind: input, shape index: {}]
  %s8 = inlined_call_operand.hbm [shape: f32[2,8,32], index: 8, kind: output, shape index: {}]
  %s9 = sld [smem:[#allocation0]]
  $region93: #{tpu_custom_call.1} parent=0
    _
  %s11 = ssub.s32 1, %s9
  %s12 = scalar_select 0, %s11, %s9
  $region1: #{tpu_custom_call.1} parent=0
    #allocation2 [shape = 'u8[8192]{0}', space=vmem, size = 0x2000, scoped, tag = 'input window, operand 0']
    #allocation3 [shape = 's32[2]{0}', space=sflag, size = 0x8, scoped, tag = 'scoped memory for tpu_custom_call.1']
    #allocation4 [shape = 's32[2]{0}', space=sflag, size = 0x8, scoped, tag = 'scoped memory for tpu_custom_call.1']
    #allocation5 [shape = 'u8[8192]{0}', space=vmem, size = 0x2000, scoped, tag = 'input window, operand 1']
    #allocation6 [shape = 's32[2]{0}', space=sflag, size = 0x8, scoped, tag = 'scoped memory for tpu_custom_call.1']
    #allocation7 [shape = 'u8[8192]{0}', space=vmem, size = 0x2000, scoped, tag = 'input window, operand 2']
    #allocation8 [shape = 'u8[16384]{0}', space=vmem, size = 0x4000, scoped, tag = 'input window, operand 4, single buffered']
    #allocation9 [shape = 's32[1]{0}', space=sflag, size = 0x4, scoped, tag = 'scoped memory for tpu_custom_call.1']
    #allocation10 [shape = 'u8[16384]{0}', space=vmem, size = 0x4000, scoped, tag = 'input window, operand 5, single buffered']
    #allocation11 [shape = 'u8[16384]{0}', space=vmem, size = 0x4000, scoped, tag = 'input window, operand 6, single buffered']
    #allocation12 [shape = 's32[1]{0}', space=sflag, size = 0x4, scoped, tag = 'scoped memory for tpu_custom_call.1']
    #allocation13 [shape = 'u8[16384]{0}', space=vmem, size = 0x4000, scoped, tag = 'input window, operand 7, single buffered']
    #allocation14 [shape = 'u8[8192]{0}', space=vmem, size = 0x2000, scoped, tag = 'output window, operand 0']
    %13 = vsyncpa [#allocation3], 0
    %s14 = scalar_lea.sflag [#allocation3], 1
    %15 = vsyncpa %s14, 0
    %16 = vsyncpa [#allocation6], 0
    %s17 = scalar_lea.sflag [#allocation6], 1
    %18 = vsyncpa %s17, 0
    %19 = vsyncpa [#allocation9], 0
    %20 = vsyncpa [#allocation12], 0
    %21 = vsyncpa [#allocation4], 0
    %s22 = scalar_lea.sflag [#allocation4], 1
    %23 = vsyncpa %s22, 0
    loop: start=0, step=1, limit=4
    $region2: #{tpu_custom_call.1} parent=1 // loop_pre_header
      _
    $region3: #{tpu_custom_call.1} parent=1 // loop_header
      %s25 = sphi 0, %s29
      %p26 = scmp.ge.s32.totalorder %s25, 4
      %s35 = sphi 0, %s37
      %s38 = sphi 0, %s35
      %s39 = sphi 0, %s38
      %s55 = sphi 0, %s39
      %s61 = sphi 0, %s63
      %s64 = sphi 0, %s61
      %s65 = sphi 0, %s64
      %s81 = sphi 0, %s65
      %s87 = sphi 0, %s89
      %s90 = sphi 0, %s87
      %s91 = sphi 0, %s90
      %s107 = sphi 0, %s91
      %s113 = sphi 0, %s115
      %s116 = sphi 0, %s113
      %s117 = sphi 0, %s116
      %s133 = sphi 0, %s117
      %s137 = sphi 0, %s137
      %s139 = sphi 0, %s137
      %s140 = sphi 0, %s139
      %s154 = sphi 0, %s140
      %s158 = sphi 0, %s158
      %s160 = sphi 0, %s158
      %s161 = sphi 0, %s160
      %s175 = sphi 0, %s161
      %s179 = sphi 0, %s179
      %s181 = sphi 0, %s179
      %s182 = sphi 0, %s181
      %s196 = sphi 0, %s182
      %s200 = sphi 0, %s200
      %s202 = sphi 0, %s200
      %s203 = sphi 0, %s202
      %s217 = sphi 0, %s203
      %s223 = sphi 0, %s225
      %s226 = sphi 0, %s223
      %s227 = sphi 0, %s226
      %s243 = sphi 0, %s227
    $region4: #{tpu_custom_call.1} parent=1 // loop_header_branch
      %28 = sbr.rel (%p26) target = $region8
    $region5: #{tpu_custom_call.1} parent=1 // loop_body
      %s30 = ssub.s32 %s25, 1
      %s31 = ssub.s32 %s25, 2
      %s32 = sadd.s32 %s25, 1
      %s33 = ssub.s32 %s25, %s32
      %p34 = scmp.eq.s32.totalorder %s33, 0
      %s36 = sadd.s32 %s35, 1
      %s37 = scalar_select %p34, %s35, %s36
      %p40 = pneg %p34
      %p41 = scmp.eq.s32.totalorder %s25, 1
      %p42 = por %p40, %p41
      %p43 = scmp.ne.s32.totalorder %s35, %s38
      %p44 = scmp.eq.s32.totalorder %s25, 0
      %p45 = por %p43, %p44
      %p46 = scmp.ne.s32.totalorder %s35, %s38
      %p47 = scmp.eq.s32.totalorder %s30, 1
      %p48 = por %p46, %p47
      %p49 = scmp.ne.s32.totalorder %s38, %s39
      %p50 = scmp.eq.s32.totalorder %s30, 0
      %p51 = por %p49, %p50
      %p52 = scmp.ne.s32.totalorder %s38, %s39
      %p53 = scmp.eq.s32.totalorder %s31, 1
      %p54 = por %p52, %p53
      %p56 = scmp.ne.s32.totalorder %s39, %s55
      %p57 = scmp.eq.s32.totalorder %s31, 0
      %p58 = por %p56, %p57
      %s59 = ssub.s32 %s25, %s32
      %p60 = scmp.eq.s32.totalorder %s59, 0
      %s62 = sadd.s32 %s61, 1
      %s63 = scalar_select %p60, %s61, %s62
      %p66 = pneg %p60
      %p67 = scmp.eq.s32.totalorder %s25, 1
      %p68 = por %p66, %p67
      %p69 = scmp.ne.s32.totalorder %s61, %s64
      %p70 = scmp.eq.s32.totalorder %s25, 0
      %p71 = por %p69, %p70
      %p72 = scmp.ne.s32.totalorder %s61, %s64
      %p73 = scmp.eq.s32.totalorder %s30, 1
      %p74 = por %p72, %p73
      %p75 = scmp.ne.s32.totalorder %s64, %s65
      %p76 = scmp.eq.s32.totalorder %s30, 0
      %p77 = por %p75, %p76
      %p78 = scmp.ne.s32.totalorder %s64, %s65
      %p79 = scmp.eq.s32.totalorder %s31, 1
      %p80 = por %p78, %p79
      %p82 = scmp.ne.s32.totalorder %s65, %s81
      %p83 = scmp.eq.s32.totalorder %s31, 0
      %p84 = por %p82, %p83
      %s85 = ssub.s32 %s25, %s32
      %p86 = scmp.eq.s32.totalorder %s85, 0
      %s88 = sadd.s32 %s87, 1
      %s89 = scalar_select %p86, %s87, %s88
      %p92 = pneg %p86
      %p93 = scmp.eq.s32.totalorder %s25, 1
      %p94 = por %p92, %p93
      %p95 = scmp.ne.s32.totalorder %s87, %s90
      %p96 = scmp.eq.s32.totalorder %s25, 0
      %p97 = por %p95, %p96
      %p98 = scmp.ne.s32.totalorder %s87, %s90
      %p99 = scmp.eq.s32.totalorder %s30, 1
      %p100 = por %p98, %p99
      %p101 = scmp.ne.s32.totalorder %s90, %s91
      %p102 = scmp.eq.s32.totalorder %s30, 0
      %p103 = por %p101, %p102
      %p104 = scmp.ne.s32.totalorder %s90, %s91
      %p105 = scmp.eq.s32.totalorder %s31, 1
      %p106 = por %p104, %p105
      %p108 = scmp.ne.s32.totalorder %s91, %s107
      %p109 = scmp.eq.s32.totalorder %s31, 0
      %p110 = por %p108, %p109
      %s111 = ssub.s32 %s25, %s32
      %p112 = scmp.eq.s32.totalorder %s111, 0
      %s114 = sadd.s32 %s113, 1
      %s115 = scalar_select %p112, %s113, %s114
      %p118 = pneg %p112
      %p119 = scmp.eq.s32.totalorder %s25, 1
      %p120 = por %p118, %p119
      %p121 = scmp.ne.s32.totalorder %s113, %s116
      %p122 = scmp.eq.s32.totalorder %s25, 0
      %p123 = por %p121, %p122
      %p124 = scmp.ne.s32.totalorder %s113, %s116
      %p125 = scmp.eq.s32.totalorder %s30, 1
      %p126 = por %p124, %p125
      %p127 = scmp.ne.s32.totalorder %s116, %s117
      %p128 = scmp.eq.s32.totalorder %s30, 0
      %p129 = por %p127, %p128
      %p130 = scmp.ne.s32.totalorder %s116, %s117
      %p131 = scmp.eq.s32.totalorder %s31, 1
      %p132 = por %p130, %p131
      %p134 = scmp.ne.s32.totalorder %s117, %s133
      %p135 = scmp.eq.s32.totalorder %s31, 0
      %p136 = por %p134, %p135
      %s138 = sadd.s32 %s137, 1
      %p141 = scmp.eq.s32.totalorder %s25, 1
      %p142 = scmp.ne.s32.totalorder %s137, %s139
      %p143 = scmp.eq.s32.totalorder %s25, 0
      %p144 = por %p142, %p143
      %p145 = scmp.ne.s32.totalorder %s137, %s139
      %p146 = scmp.eq.s32.totalorder %s30, 1
      %p147 = por %p145, %p146
      %p148 = scmp.ne.s32.totalorder %s139, %s140
      %p149 = scmp.eq.s32.totalorder %s30, 0
      %p150 = por %p148, %p149
      %p151 = scmp.ne.s32.totalorder %s139, %s140
      %p152 = scmp.eq.s32.totalorder %s31, 1
      %p153 = por %p151, %p152
      %p155 = scmp.ne.s32.totalorder %s140, %s154
      %p156 = scmp.eq.s32.totalorder %s31, 0
      %p157 = por %p155, %p156
      %s159 = sadd.s32 %s158, 1
      %p162 = scmp.eq.s32.totalorder %s25, 1
      %p163 = scmp.ne.s32.totalorder %s158, %s160
      %p164 = scmp.eq.s32.totalorder %s25, 0
      %p165 = por %p163, %p164
      %p166 = scmp.ne.s32.totalorder %s158, %s160
      %p167 = scmp.eq.s32.totalorder %s30, 1
      %p168 = por %p166, %p167
      %p169 = scmp.ne.s32.totalorder %s160, %s161
      %p170 = scmp.eq.s32.totalorder %s30, 0
      %p171 = por %p169, %p170
      %p172 = scmp.ne.s32.totalorder %s160, %s161
      %p173 = scmp.eq.s32.totalorder %s31, 1
      %p174 = por %p172, %p173
      %p176 = scmp.ne.s32.totalorder %s161, %s175
      %p177 = scmp.eq.s32.totalorder %s31, 0
      %p178 = por %p176, %p177
      %s180 = sadd.s32 %s179, 1
      %p183 = scmp.eq.s32.totalorder %s25, 1
      %p184 = scmp.ne.s32.totalorder %s179, %s181
      %p185 = scmp.eq.s32.totalorder %s25, 0
      %p186 = por %p184, %p185
      %p187 = scmp.ne.s32.totalorder %s179, %s181
      %p188 = scmp.eq.s32.totalorder %s30, 1
      %p189 = por %p187, %p188
      %p190 = scmp.ne.s32.totalorder %s181, %s182
      %p191 = scmp.eq.s32.totalorder %s30, 0
      %p192 = por %p190, %p191
      %p193 = scmp.ne.s32.totalorder %s181, %s182
      %p194 = scmp.eq.s32.totalorder %s31, 1
      %p195 = por %p193, %p194
      %p197 = scmp.ne.s32.totalorder %s182, %s196
      %p198 = scmp.eq.s32.totalorder %s31, 0
      %p199 = por %p197, %p198
      %s201 = sadd.s32 %s200, 1
      %p204 = scmp.eq.s32.totalorder %s25, 1
      %p205 = scmp.ne.s32.totalorder %s200, %s202
      %p206 = scmp.eq.s32.totalorder %s25, 0
      %p207 = por %p205, %p206
      %p208 = scmp.ne.s32.totalorder %s200, %s202
      %p209 = scmp.eq.s32.totalorder %s30, 1
      %p210 = por %p208, %p209
      %p211 = scmp.ne.s32.totalorder %s202, %s203
      %p212 = scmp.eq.s32.totalorder %s30, 0
      %p213 = por %p211, %p212
      %p214 = scmp.ne.s32.totalorder %s202, %s203
      %p215 = scmp.eq.s32.totalorder %s31, 1
      %p216 = por %p214, %p215
      %p218 = scmp.ne.s32.totalorder %s203, %s217
      %p219 = scmp.eq.s32.totalorder %s31, 0
      %p220 = por %p218, %p219
      %s221 = ssub.s32 %s25, %s32
      %p222 = scmp.eq.s32.totalorder %s221, 0
      %s224 = sadd.s32 %s223, 1
      %s225 = scalar_select %p222, %s223, %s224
      %p228 = pneg %p222
      %p229 = scmp.eq.s32.totalorder %s25, 1
      %p230 = por %p228, %p229
      %p231 = scmp.ne.s32.totalorder %s223, %s226
      %p232 = scmp.eq.s32.totalorder %s25, 0
      %p233 = por %p231, %p232
      %p234 = scmp.ne.s32.totalorder %s223, %s226
      %p235 = scmp.eq.s32.totalorder %s30, 1
      %p236 = por %p234, %p235
      %p237 = scmp.ne.s32.totalorder %s226, %s227
      %p238 = scmp.eq.s32.totalorder %s30, 0
      %p239 = por %p237, %p238
      %p240 = scmp.ne.s32.totalorder %s226, %s227
      %p241 = scmp.eq.s32.totalorder %s31, 1
      %p242 = por %p240, %p241
      %p244 = scmp.ne.s32.totalorder %s227, %s243
      %p245 = scmp.eq.s32.totalorder %s31, 0
      %p246 = por %p244, %p245
      %p247 = scmp.le.s32.totalorder 1, %s25
      %p248 = scmp.lt.s32.totalorder %s25, 3
      %p249 = pnand %p247, %p248
      %p250 = pneg %p249
      // Predicated region
      $region9: #{tpu_custom_call.1} parent=5 // pred_check
        _
      $region10: #{tpu_custom_call.1} parent=5 // pred_check_branch
        %252 = sbr.rel (%p249) target = $region12
      $region11: #{tpu_custom_call.1} parent=5 // pred_region
        %s253 = ssub.s32 %s25, 1
        // Predicated region
        $region13: #{tpu_custom_call.1} parent=11 // pred_check
          %p254 = pneg %p150
        $region14: #{tpu_custom_call.1} parent=11 // pred_check_branch
          %256 = sbr.rel (%p254) target = $region16
        $region15: #{tpu_custom_call.1} parent=11 // pred_region
          %s258 = ssub.s32 512, 512
          %259 = vsyncadd [#allocation9], %s258
          %s260 = sshll.u32 [#allocation8], 4
          %s261 = int_to_ptr.vmem [resolvable:$true] %s260
          %266 = dma.hbm_to_vmem [thread:$0]  %s4, 512, %s261, [#allocation9], 128, 128, 8
        $region16: #{tpu_custom_call.1} parent=11 // pred_fallthru
          _
        // Predicated region
        $region17: #{tpu_custom_call.1} parent=11 // pred_check
          %p267 = pneg %p171
        $region18: #{tpu_custom_call.1} parent=11 // pred_check_branch
          %269 = sbr.rel (%p267) target = $region20
        $region19: #{tpu_custom_call.1} parent=11 // pred_region
          %s271 = ssub.s32 512, 512
          %272 = vsyncadd [#allocation9], %s271
          %s273 = sshll.u32 [#allocation10], 4
          %s274 = int_to_ptr.vmem [resolvable:$true] %s273
          %279 = dma.hbm_to_vmem [thread:$0]  %s5, 512, %s274, [#allocation9], 128, 128, 8
        $region20: #{tpu_custom_call.1} parent=11 // pred_fallthru
          _
        // Predicated region
        $region21: #{tpu_custom_call.1} parent=11 // pred_check
          %p280 = pneg %p192
        $region22: #{tpu_custom_call.1} parent=11 // pred_check_branch
          %282 = sbr.rel (%p280) target = $region24
        $region23: #{tpu_custom_call.1} parent=11 // pred_region
          %s284 = ssub.s32 512, 512
          %285 = vsyncadd [#allocation12], %s284
          %s286 = sshll.u32 [#allocation11], 4
          %s287 = int_to_ptr.vmem [resolvable:$true] %s286
          %292 = dma.hbm_to_vmem [thread:$0]  %s6, 512, %s287, [#allocation12], 128, 128, 8
        $region24: #{tpu_custom_call.1} parent=11 // pred_fallthru
          _
        // Predicated region
        $region25: #{tpu_custom_call.1} parent=11 // pred_check
          %p293 = pneg %p213
        $region26: #{tpu_custom_call.1} parent=11 // pred_check_branch
          %295 = sbr.rel (%p293) target = $region28
        $region27: #{tpu_custom_call.1} parent=11 // pred_region
          %s297 = ssub.s32 512, 512
          %298 = vsyncadd [#allocation12], %s297
          %s299 = sshll.u32 [#allocation13], 4
          %s300 = int_to_ptr.vmem [resolvable:$true] %s299
          %305 = dma.hbm_to_vmem [thread:$0]  %s7, 512, %s300, [#allocation12], 128, 128, 8
        $region28: #{tpu_custom_call.1} parent=11 // pred_fallthru
          _
      $region12: #{tpu_custom_call.1} parent=5 // pred_fallthru
        _
      %p306 = scmp.lt.s32.totalorder %s25, 2
      // Predicated region
      $region29: #{tpu_custom_call.1} parent=5 // pred_check
        %p307 = pneg %p306
      $region30: #{tpu_custom_call.1} parent=5 // pred_check_branch
        %309 = sbr.rel (%p307) target = $region32
      $region31: #{tpu_custom_call.1} parent=5 // pred_region
        // Predicated region
        $region33: #{tpu_custom_call.1} parent=31 // pred_check
          %p310 = pneg %p45
        $region34: #{tpu_custom_call.1} parent=31 // pred_check_branch
          %312 = sbr.rel (%p310) target = $region36
        $region35: #{tpu_custom_call.1} parent=31 // pred_region
          %s313 = sand.u32 %s35, 1
          %s314 = scalar_lea.sflag [#allocation3], %s313
          %s315 = sand.u32 %s35, 1
          %s316 = smul.addr %s315, 8
          %s317 = scalar_lea.vmem [#allocation2], %s316
          %s319 = ssub.s32 128, 128
          %320 = vsyncadd %s314, %s319
          %s321 = smul.addr %s25, 128
          %s322 = scalar_lea.hbm %s0, %s321
          %s324 = sshll.u32 %s317, 4
          %s325 = int_to_ptr.vmem [resolvable:$true] %s324
          %327 = dma.hbm_to_vmem [thread:$0]  %s322, 128, %s325, %s314
        $region36: #{tpu_custom_call.1} parent=31 // pred_fallthru
          _
        // Predicated region
        $region37: #{tpu_custom_call.1} parent=31 // pred_check
          %p328 = pneg %p71
        $region38: #{tpu_custom_call.1} parent=31 // pred_check_branch
          %330 = sbr.rel (%p328) target = $region40
        $region39: #{tpu_custom_call.1} parent=31 // pred_region
          %s331 = sand.u32 %s25, 1
          %s332 = scalar_lea.sflag [#allocation6], %s331
          %s333 = sand.u32 %s61, 1
          %s334 = smul.addr %s333, 8
          %s335 = scalar_lea.vmem [#allocation5], %s334
          %s337 = ssub.s32 128, 128
          %338 = vsyncadd %s332, %s337
          %s339 = smul.addr %s25, 128
          %s340 = scalar_lea.hbm %s1, %s339
          %s342 = sshll.u32 %s335, 4
          %s343 = int_to_ptr.vmem [resolvable:$true] %s342
          %345 = dma.hbm_to_vmem [thread:$0]  %s340, 128, %s343, %s332
        $region40: #{tpu_custom_call.1} parent=31 // pred_fallthru
          _
        // Predicated region
        $region41: #{tpu_custom_call.1} parent=31 // pred_check
          %p346 = pneg %p97
        $region42: #{tpu_custom_call.1} parent=31 // pred_check_branch
          %348 = sbr.rel (%p346) target = $region44
        $region43: #{tpu_custom_call.1} parent=31 // pred_region
          %s349 = sand.u32 %s25, 1
          %s350 = scalar_lea.sflag [#allocation6], %s349
          %s351 = sand.u32 %s87, 1
          %s352 = smul.addr %s351, 8
          %s353 = scalar_lea.vmem [#allocation7], %s352
          %s355 = ssub.s32 128, 128
          %356 = vsyncadd %s350, %s355
          %s357 = smul.addr %s25, 128
          %s358 = scalar_lea.hbm %s2, %s357
          %s360 = sshll.u32 %s353, 4
          %s361 = int_to_ptr.vmem [resolvable:$true] %s360
          %363 = dma.hbm_to_vmem [thread:$0]  %s358, 128, %s361, %s350
        $region44: #{tpu_custom_call.1} parent=31 // pred_fallthru
          _
        // Predicated region
        $region45: #{tpu_custom_call.1} parent=31 // pred_check
          %p364 = pneg %p123
        $region46: #{tpu_custom_call.1} parent=31 // pred_check_branch
          %366 = sbr.rel (%p364) target = $region48
        $region47: #{tpu_custom_call.1} parent=31 // pred_region
          %p367 = scmp.lt.s32.totalorder %s25, 1
          %s368 = scalar_select %p367, %s25, 1
          %s369 = scalar_lea.vmem %s3, %s368
        $region48: #{tpu_custom_call.1} parent=31 // pred_fallthru
          _
      $region32: #{tpu_custom_call.1} parent=5 // pred_fallthru
        _
      %p370 = scmp.le.s32.totalorder 1, %s25
      %p371 = scmp.lt.s32.totalorder %s25, 3
      %p372 = pnand %p370, %p371
      %p373 = pneg %p372
      // Predicated region
      $region49: #{tpu_custom_call.1} parent=5 // pred_check
        _
      $region50: #{tpu_custom_call.1} parent=5 // pred_check_branch
        %375 = sbr.rel (%p372) target = $region52
      $region51: #{tpu_custom_call.1} parent=5 // pred_region
        %s376 = ssub.s32 %s25, 1
        %s377 = sand.u32 %s38, 1
        %s378 = scalar_lea.sflag [#allocation3], %s377
        %s379 = sand.u32 %s38, 1
        %s380 = smul.addr %s379, 8
        %s381 = scalar_lea.vmem [#allocation2], %s380
        // Predicated region
        $region53: #{tpu_custom_call.1} parent=51 // pred_check
          %p382 = pneg %p51
        $region54: #{tpu_custom_call.1} parent=51 // pred_check_branch
          %384 = sbr.rel (%p382) target = $region56
        $region55: #{tpu_custom_call.1} parent=51 // pred_region
          %385 = dma.done %s378, 128
        $region56: #{tpu_custom_call.1} parent=51 // pred_fallthru
          _
        %s386 = sand.u32 %s30, 1
        %s387 = scalar_lea.sflag [#allocation6], %s386
        %s388 = sand.u32 %s64, 1
        %s389 = smul.addr %s388, 8
        %s390 = scalar_lea.vmem [#allocation5], %s389
        // Predicated region
        $region57: #{tpu_custom_call.1} parent=51 // pred_check
          %p391 = pneg %p77
        $region58: #{tpu_custom_call.1} parent=51 // pred_check_branch
          %393 = sbr.rel (%p391) target = $region60
        $region59: #{tpu_custom_call.1} parent=51 // pred_region
          %394 = dma.done %s387, 128
        $region60: #{tpu_custom_call.1} parent=51 // pred_fallthru
          _
        %s395 = sand.u32 %s30, 1
        %s396 = scalar_lea.sflag [#allocation6], %s395
        %s397 = sand.u32 %s90, 1
        %s398 = smul.addr %s397, 8
        %s399 = scalar_lea.vmem [#allocation7], %s398
        // Predicated region
        $region61: #{tpu_custom_call.1} parent=51 // pred_check
          %p400 = pneg %p103
        $region62: #{tpu_custom_call.1} parent=51 // pred_check_branch
          %402 = sbr.rel (%p400) target = $region64
        $region63: #{tpu_custom_call.1} parent=51 // pred_region
          %403 = dma.done %s396, 128
        $region64: #{tpu_custom_call.1} parent=51 // pred_fallthru
          _
        // Predicated region
        $region65: #{tpu_custom_call.1} parent=51 // pred_check
          %p404 = pneg %p150
        $region66: #{tpu_custom_call.1} parent=51 // pred_check_branch
          %406 = sbr.rel (%p404) target = $region68
        $region67: #{tpu_custom_call.1} parent=51 // pred_region
          %407 = dma.done [#allocation9], 512
        $region68: #{tpu_custom_call.1} parent=51 // pred_fallthru
          _
        // Predicated region
        $region69: #{tpu_custom_call.1} parent=51 // pred_check
          %p408 = pneg %p171
        $region70: #{tpu_custom_call.1} parent=51 // pred_check_branch
          %410 = sbr.rel (%p408) target = $region72
        $region71: #{tpu_custom_call.1} parent=51 // pred_region
          %411 = dma.done [#allocation9], 512
        $region72: #{tpu_custom_call.1} parent=51 // pred_fallthru
          _
        // Predicated region
        $region73: #{tpu_custom_call.1} parent=51 // pred_check
          %p412 = pneg %p192
        $region74: #{tpu_custom_call.1} parent=51 // pred_check_branch
          %414 = sbr.rel (%p412) target = $region76
        $region75: #{tpu_custom_call.1} parent=51 // pred_region
          %415 = dma.done [#allocation12], 512
        $region76: #{tpu_custom_call.1} parent=51 // pred_fallthru
          _
        // Predicated region
        $region77: #{tpu_custom_call.1} parent=51 // pred_check
          %p416 = pneg %p213
        $region78: #{tpu_custom_call.1} parent=51 // pred_check_branch
          %418 = sbr.rel (%p416) target = $region80
        $region79: #{tpu_custom_call.1} parent=51 // pred_region
          %419 = dma.done [#allocation12], 512
        $region80: #{tpu_custom_call.1} parent=51 // pred_fallthru
          _
        %s420 = sand.u32 %s38, 1
        %s421 = scalar_lea.sflag [#allocation3], %s420
        %s422 = sand.u32 %s38, 1
        %s423 = smul.addr %s422, 8
        %s424 = scalar_lea.vmem [#allocation2], %s423
        %p425 = pneg %p51
        %p426 = pneg %p48
        %s427 = sand.u32 %s30, 1
        %s428 = scalar_lea.sflag [#allocation6], %s427
        %s429 = sand.u32 %s64, 1
        %s430 = smul.addr %s429, 8
        %s431 = scalar_lea.vmem [#allocation5], %s430
        %p432 = pneg %p77
        %p433 = pneg %p74
        %s434 = sand.u32 %s30, 1
        %s435 = scalar_lea.sflag [#allocation6], %s434
        %s436 = sand.u32 %s90, 1
        %s437 = smul.addr %s436, 8
        %s438 = scalar_lea.vmem [#allocation7], %s437
        %p439 = pneg %p103
        %p440 = pneg %p100
        %p441 = scmp.lt.s32.totalorder %s30, 1
        %s442 = scalar_select %p441, %s30, 1
        %s443 = scalar_lea.vmem %s3, %s442
        %p444 = pneg %p129
        %p445 = pneg %p126
        %p446 = pneg %p150
        %p447 = pneg %p147
        %p448 = pneg %p171
        %p449 = pneg %p168
        %p450 = pneg %p192
        %p451 = pneg %p189
        %p452 = pneg %p213
        %p453 = pneg %p210
        %p454 = pneg %p239
        %p455 = pneg %p236
        %s456 = sand.u32 %s226, 1
        %s457 = scalar_lea.sflag [#allocation4], %s456
        %s458 = sand.u32 %s226, 1
        %s459 = smul.addr %s458, 8
        %s460 = scalar_lea.vmem [#allocation14], %s459
        %p461 = scmp.lt.s32.totalorder %s30, 1
        %s462 = scalar_select %p461, %s30, 1
        %s463 = scalar_lea.vmem %s3, %s462
        %v464 = vld [vmem:[%s381] sm:$0xff]
        %v465 = vld [vmem:[%s390] sm:$0xff]
        %v466 = vld [vmem:[%s399] sm:$0xff]
        %v467 = vld [vmem:[#allocation8] sm:$0xff]
        %v468 = vld [vmem:[#allocation8 + $0x8] sm:$0xff]
        %v469 = vld [vmem:[#allocation8 + $0x10] sm:$0xff]
        %v470 = vld [vmem:[#allocation8 + $0x18] sm:$0xff]
        %vm471 = vcmask 261120
        %v473 = vsel %vm471, %v464, 0
        %475 = vmatprep.subr.mxu0 0.0
        %476 = vmatpush1.msra.mxu0 %v467
        %477 = vmatprep.subr.mxu0 0.0
        %478 = vmatpush1.msra.mxu0 %v468
        %479 = vmatprep.subr.mxu0 0.0
        %480 = vmatpush1.msra.mxu0 %v469
        %481 = vmatprep.subr.mxu0 0.0
        %482 = vmatpush1.msra.mxu0 %v470
        %483 = vmatprep.subr.mxu0 0.0
        %484 = vmatpush1.msra.mxu0 0.0
        %485 = vmatprep.subr.mxu0 0.0
        %486 = vmatpush1.msra.mxu0 0.0
        %487 = vmatprep.subr.mxu0 0.0
        %488 = vmatpush1.msra.mxu0 0.0
        %489 = vmatprep.subr.mxu0 0.0
        %490 = vmatpush1.msra.mxu0 0.0
        %491 = vmatprep.subr.mxu0 0.0
        %492 = vmatpush1.msra.mxu0 0.0
        %493 = vmatprep.subr.mxu0 0.0
        %494 = vmatpush1.msra.mxu0 0.0
        %495 = vmatprep.subr.mxu0 0.0
        %496 = vmatpush1.msra.mxu0 0.0
        %497 = vmatprep.subr.mxu0 0.0
        %498 = vmatpush1.msra.mxu0 0.0
        %499 = vmatprep.subr.mxu0 0.0
        %500 = vmatpush1.msra.mxu0 0.0
        %501 = vmatprep.subr.mxu0 0.0
        %502 = vmatpush1.msra.mxu0 0.0
        %503 = vmatprep.subr.mxu0 0.0
        %504 = vmatpush1.msra.mxu0 0.0
        %505 = vmatprep.subr.mxu0 0.0
        %506 = vmatpush1.msra.mxu0 0.0
        %507 = vmatprep.subr.mxu0 0.0
        %508 = vmatpush1.msra.mxu0 0.0
        %509 = vmatprep.subr.mxu0 0.0
        %510 = vmatpush1.msra.mxu0 0.0
        %511 = vmatprep.subr.mxu0 0.0
        %512 = vmatpush1.msra.mxu0 0.0
        %513 = vmatprep.subr.mxu0 0.0
        %514 = vmatpush1.msra.mxu0 0.0
        %515 = vmatprep.subr.mxu0 0.0
        %516 = vmatpush1.msra.mxu0 0.0
        %517 = vmatprep.subr.mxu0 0.0
        %518 = vmatpush1.msra.mxu0 0.0
        %519 = vmatprep.subr.mxu0 0.0
        %520 = vmatpush1.msra.mxu0 0.0
        %521 = vmatprep.subr.mxu0 0.0
        %522 = vmatpush1.msra.mxu0 0.0
        %523 = vmatprep.subr.mxu0 0.0
        %524 = vmatpush1.msra.mxu0 0.0
        %525 = vmatprep.subr.mxu0 0.0
        %526 = vmatpush1.msra.mxu0 0.0
        %527 = vmatprep.subr.mxu0 0.0
        %528 = vmatpush1.msra.mxu0 0.0
        %529 = vmatprep.subr.mxu0 0.0
        %530 = vmatpush1.msra.mxu0 0.0
        %531 = vmatprep.subr.mxu0 0.0
        %532 = vmatpush1.msra.mxu0 0.0
        %533 = vmatprep.subr.mxu0 0.0
        %534 = vmatpush1.msra.mxu0 0.0
        %535 = vmatprep.subr.mxu0 0.0
        %536 = vmatpush1.msra.mxu0 0.0
        %537 = vmatprep.subr.mxu0 0.0
        %538 = vmatpush1.msra.mxu0 0.0
        %539 = vmatprep.mubr.f32.mxu0 0.0
        %540 = vmatmul.mubr.f32.gmra.mrb[0].mxu0 %v473
        %v541 = vpop.f32.mrb[0].mxu0
        %v542 = vadd.f32 0.0, %v541
        %v543 = vpop.f32.mrb[0].mxu0
        %544 = vdwg.mxu0
        %v545 = vld [vmem:[#allocation10] sm:$0xff]
        %v546 = vld [vmem:[#allocation10 + $0x8] sm:$0xff]
        %v547 = vld [vmem:[#allocation10 + $0x10] sm:$0xff]
        %v548 = vld [vmem:[#allocation10 + $0x18] sm:$0xff]
        %v550 = vsel %vm471, %v465, 0
        %552 = vmatprep.subr.mxu0 0.0
        %553 = vmatpush1.msra.mxu0 %v545
        %554 = vmatprep.subr.mxu0 0.0
        %555 = vmatpush1.msra.mxu0 %v546
        %556 = vmatprep.subr.mxu0 0.0
        %557 = vmatpush1.msra.mxu0 %v547
        %558 = vmatprep.subr.mxu0 0.0
        %559 = vmatpush1.msra.mxu0 %v548
        %560 = vmatprep.subr.mxu0 0.0
        %561 = vmatpush1.msra.mxu0 0.0
        %562 = vmatprep.subr.mxu0 0.0
        %563 = vmatpush1.msra.mxu0 0.0
        %564 = vmatprep.subr.mxu0 0.0
        %565 = vmatpush1.msra.mxu0 0.0
        %566 = vmatprep.subr.mxu0 0.0
        %567 = vmatpush1.msra.mxu0 0.0
        %568 = vmatprep.subr.mxu0 0.0
        %569 = vmatpush1.msra.mxu0 0.0
        %570 = vmatprep.subr.mxu0 0.0
        %571 = vmatpush1.msra.mxu0 0.0
        %572 = vmatprep.subr.mxu0 0.0
        %573 = vmatpush1.msra.mxu0 0.0
        %574 = vmatprep.subr.mxu0 0.0
        %575 = vmatpush1.msra.mxu0 0.0
        %576 = vmatprep.subr.mxu0 0.0
        %577 = vmatpush1.msra.mxu0 0.0
        %578 = vmatprep.subr.mxu0 0.0
        %579 = vmatpush1.msra.mxu0 0.0
        %580 = vmatprep.subr.mxu0 0.0
        %581 = vmatpush1.msra.mxu0 0.0
        %582 = vmatprep.subr.mxu0 0.0
        %583 = vmatpush1.msra.mxu0 0.0
        %584 = vmatprep.subr.mxu0 0.0
        %585 = vmatpush1.msra.mxu0 0.0
        %586 = vmatprep.subr.mxu0 0.0
        %587 = vmatpush1.msra.mxu0 0.0
        %588 = vmatprep.subr.mxu0 0.0
        %589 = vmatpush1.msra.mxu0 0.0
        %590 = vmatprep.subr.mxu0 0.0
        %591 = vmatpush1.msra.mxu0 0.0
        %592 = vmatprep.subr.mxu0 0.0
        %593 = vmatpush1.msra.mxu0 0.0
        %594 = vmatprep.subr.mxu0 0.0
        %595 = vmatpush1.msra.mxu0 0.0
        %596 = vmatprep.subr.mxu0 0.0
        %597 = vmatpush1.msra.mxu0 0.0
        %598 = vmatprep.subr.mxu0 0.0
        %599 = vmatpush1.msra.mxu0 0.0
        %600 = vmatprep.subr.mxu0 0.0
        %601 = vmatpush1.msra.mxu0 0.0
        %602 = vmatprep.subr.mxu0 0.0
        %603 = vmatpush1.msra.mxu0 0.0
        %604 = vmatprep.subr.mxu0 0.0
        %605 = vmatpush1.msra.mxu0 0.0
        %606 = vmatprep.subr.mxu0 0.0
        %607 = vmatpush1.msra.mxu0 0.0
        %608 = vmatprep.subr.mxu0 0.0
        %609 = vmatpush1.msra.mxu0 0.0
        %610 = vmatprep.subr.mxu0 0.0
        %611 = vmatpush1.msra.mxu0 0.0
        %612 = vmatprep.subr.mxu0 0.0
        %613 = vmatpush1.msra.mxu0 0.0
        %614 = vmatprep.subr.mxu0 0.0
        %615 = vmatpush1.msra.mxu0 0.0
        %616 = vmatprep.mubr.f32.mxu0 0.0
        %617 = vmatmul.mubr.f32.gmra.mrb[0].mxu0 %v550
        %v618 = vpop.f32.mrb[0].mxu0
        %v619 = vadd.f32 0.0, %v618
        %v620 = vpop.f32.mrb[0].mxu0
        %621 = vdwg.mxu0
        %v622 = vld [vmem:[#allocation11] sm:$0xff]
        %v623 = vld [vmem:[#allocation11 + $0x8] sm:$0xff]
        %v624 = vld [vmem:[#allocation11 + $0x10] sm:$0xff]
        %v625 = vld [vmem:[#allocation11 + $0x18] sm:$0xff]
        %v627 = vsel %vm471, %v466, 0
        %629 = vmatprep.subr.mxu0 0.0
        %630 = vmatpush1.msra.mxu0 %v622
        %631 = vmatprep.subr.mxu0 0.0
        %632 = vmatpush1.msra.mxu0 %v623
        %633 = vmatprep.subr.mxu0 0.0
        %634 = vmatpush1.msra.mxu0 %v624
        %635 = vmatprep.subr.mxu0 0.0
        %636 = vmatpush1.msra.mxu0 %v625
        %637 = vmatprep.subr.mxu0 0.0
        %638 = vmatpush1.msra.mxu0 0.0
        %639 = vmatprep.subr.mxu0 0.0
        %640 = vmatpush1.msra.mxu0 0.0
        %641 = vmatprep.subr.mxu0 0.0
        %642 = vmatpush1.msra.mxu0 0.0
        %643 = vmatprep.subr.mxu0 0.0
        %644 = vmatpush1.msra.mxu0 0.0
        %645 = vmatprep.subr.mxu0 0.0
        %646 = vmatpush1.msra.mxu0 0.0
        %647 = vmatprep.subr.mxu0 0.0
        %648 = vmatpush1.msra.mxu0 0.0
        %649 = vmatprep.subr.mxu0 0.0
        %650 = vmatpush1.msra.mxu0 0.0
        %651 = vmatprep.subr.mxu0 0.0
        %652 = vmatpush1.msra.mxu0 0.0
        %653 = vmatprep.subr.mxu0 0.0
        %654 = vmatpush1.msra.mxu0 0.0
        %655 = vmatprep.subr.mxu0 0.0
        %656 = vmatpush1.msra.mxu0 0.0
        %657 = vmatprep.subr.mxu0 0.0
        %658 = vmatpush1.msra.mxu0 0.0
        %659 = vmatprep.subr.mxu0 0.0
        %660 = vmatpush1.msra.mxu0 0.0
        %661 = vmatprep.subr.mxu0 0.0
        %662 = vmatpush1.msra.mxu0 0.0
        %663 = vmatprep.subr.mxu0 0.0
        %664 = vmatpush1.msra.mxu0 0.0
        %665 = vmatprep.subr.mxu0 0.0
        %666 = vmatpush1.msra.mxu0 0.0
        %667 = vmatprep.subr.mxu0 0.0
        %668 = vmatpush1.msra.mxu0 0.0
        %669 = vmatprep.subr.mxu0 0.0
        %670 = vmatpush1.msra.mxu0 0.0
        %671 = vmatprep.subr.mxu0 0.0
        %672 = vmatpush1.msra.mxu0 0.0
        %673 = vmatprep.subr.mxu0 0.0
        %674 = vmatpush1.msra.mxu0 0.0
        %675 = vmatprep.subr.mxu0 0.0
        %676 = vmatpush1.msra.mxu0 0.0
        %677 = vmatprep.subr.mxu0 0.0
        %678 = vmatpush1.msra.mxu0 0.0
        %679 = vmatprep.subr.mxu0 0.0
        %680 = vmatpush1.msra.mxu0 0.0
        %681 = vmatprep.subr.mxu0 0.0
        %682 = vmatpush1.msra.mxu0 0.0
        %683 = vmatprep.subr.mxu0 0.0
        %684 = vmatpush1.msra.mxu0 0.0
        %685 = vmatprep.subr.mxu0 0.0
        %686 = vmatpush1.msra.mxu0 0.0
        %687 = vmatprep.subr.mxu0 0.0
        %688 = vmatpush1.msra.mxu0 0.0
        %689 = vmatprep.subr.mxu0 0.0
        %690 = vmatpush1.msra.mxu0 0.0
        %691 = vmatprep.subr.mxu0 0.0
        %692 = vmatpush1.msra.mxu0 0.0
        %693 = vmatprep.mubr.f32.mxu0 0.0
        %694 = vmatmul.mubr.f32.gmra.mrb[0].mxu0 %v627
        %v695 = vpop.f32.mrb[0].mxu0
        %v696 = vadd.f32 0.0, %v695
        %v697 = vpop.f32.mrb[0].mxu0
        %698 = vdwg.mxu0
        %v699 = vlaneseq
        %v700 = vand.u32 %v699, 127
        %v701 = vld [vmem:[%s463] sm:$0x1]
        %702 = vset.pattern.permute.xlu0 0
        %703 = vperm.xlu0 %702, %v701
        %v704 = vpop.permute.xlu0 %703
        %v705 = vlaneseq
        %v706 = vshrl.u32 %v705, 7
        %v707 = vsub.s32 0, %v706
        %v708 = vrot.slane %v704, %v707
        %vm709 = vcmp.lt.s32.totalorder %v700, %v708
        %vm710 = vcmask 64512
        %v712 = vsel %vm710, %v542, 0
        %v715 = vsel %vm710, %v619, 0
        %717 = vmatprep.subr.mxu0 0.0
        %718 = vmatpush1.xpose.msra.mxu0 %v715
        %719 = vmatprep.subr.mxu0 0.0
        %720 = vmatpush1.xpose.msra.mxu0 0.0
        %721 = vmatprep.subr.mxu0 0.0
        %722 = vmatpush1.xpose.msra.mxu0 0.0
        %723 = vmatprep.subr.mxu0 0.0
        %724 = vmatpush1.xpose.msra.mxu0 0.0
        %725 = vmatprep.subr.mxu0 0.0
        %726 = vmatpush1.xpose.msra.mxu0 0.0
        %727 = vmatprep.subr.mxu0 0.0
        %728 = vmatpush1.xpose.msra.mxu0 0.0
        %729 = vmatprep.subr.mxu0 0.0
        %730 = vmatpush1.xpose.msra.mxu0 0.0
        %731 = vmatprep.subr.mxu0 0.0
        %732 = vmatpush1.xpose.msra.mxu0 0.0
        %733 = vmatprep.subr.mxu0 0.0
        %734 = vmatpush1.xpose.msra.mxu0 0.0
        %735 = vmatprep.subr.mxu0 0.0
        %736 = vmatpush1.xpose.msra.mxu0 0.0
        %737 = vmatprep.subr.mxu0 0.0
        %738 = vmatpush1.xpose.msra.mxu0 0.0
        %739 = vmatprep.subr.mxu0 0.0
        %740 = vmatpush1.xpose.msra.mxu0 0.0
        %741 = vmatprep.subr.mxu0 0.0
        %742 = vmatpush1.xpose.msra.mxu0 0.0
        %743 = vmatprep.subr.mxu0 0.0
        %744 = vmatpush1.xpose.msra.mxu0 0.0
        %745 = vmatprep.subr.mxu0 0.0
        %746 = vmatpush1.xpose.msra.mxu0 0.0
        %747 = vmatprep.subr.mxu0 0.0
        %748 = vmatpush1.xpose.msra.mxu0 0.0
        %749 = vmatprep.subr.mxu0 0.0
        %750 = vmatpush1.xpose.msra.mxu0 0.0
        %751 = vmatprep.subr.mxu0 0.0
        %752 = vmatpush1.xpose.msra.mxu0 0.0
        %753 = vmatprep.subr.mxu0 0.0
        %754 = vmatpush1.xpose.msra.mxu0 0.0
        %755 = vmatprep.subr.mxu0 0.0
        %756 = vmatpush1.xpose.msra.mxu0 0.0
        %757 = vmatprep.subr.mxu0 0.0
        %758 = vmatpush1.xpose.msra.mxu0 0.0
        %759 = vmatprep.subr.mxu0 0.0
        %760 = vmatpush1.xpose.msra.mxu0 0.0
        %761 = vmatprep.subr.mxu0 0.0
        %762 = vmatpush1.xpose.msra.mxu0 0.0
        %763 = vmatprep.subr.mxu0 0.0
        %764 = vmatpush1.xpose.msra.mxu0 0.0
        %765 = vmatprep.subr.mxu0 0.0
        %766 = vmatpush1.xpose.msra.mxu0 0.0
        %767 = vmatprep.subr.mxu0 0.0
        %768 = vmatpush1.xpose.msra.mxu0 0.0
        %769 = vmatprep.subr.mxu0 0.0
        %770 = vmatpush1.xpose.msra.mxu0 0.0
        %771 = vmatprep.subr.mxu0 0.0
        %772 = vmatpush1.xpose.msra.mxu0 0.0
        %773 = vmatprep.subr.mxu0 0.0
        %774 = vmatpush1.xpose.msra.mxu0 0.0
        %775 = vmatprep.subr.mxu0 0.0
        %776 = vmatpush1.xpose.msra.mxu0 0.0
        %777 = vmatprep.subr.mxu0 0.0
        %778 = vmatpush1.xpose.msra.mxu0 0.0
        %779 = vmatprep.subr.mxu0 0.0
        %780 = vmatpush1.xpose.msra.mxu0 0.0
        %781 = vmatprep.mubr.f32.mxu0 0.0
        %782 = vmatmul.mubr.f32.gmra.mrb[0].mxu0 %v712
        %v783 = vpop.f32.mrb[0].mxu0
        %v784 = vadd.f32 0.0, %v783
        %v785 = vpop.f32.mrb[0].mxu0
        %786 = vdwg.mxu0
        %v787 = vsel %vm709, 1, 0
        %vm788 = vcmp.eq.s32.totalorder %v787, 1
        %v789 = vsel %vm788, %v784, -1000000.0
        %v790 = vsel %vm710, %v789, -inf
        %791 = vmax.xlane.f32.xlu0 %v790
        %v792 = vpop.xlane.xlu0 %791
        %v793 = vsub.f32 %v789, %v792
        %v794 = vmul.f32 %v793, 1.442695
        %v795 = vpow.pop %v794
        %v796 = vsel %vm710, %v795, 0.0
        %797 = vadd.xlane.f32.xlu0 %v796
        %v798 = vpop.xlane.xlu0 %797
        %v799 = vrcp.pop %v798
        %v800 = vmul.f32 %v798, %v799
        %v801 = vsub.f32 2.0, %v800
        %v802 = vmul.f32 %v799, %v801
        %v803 = vmul.f32 %v795, %v802
        %v805 = vsel %vm710, %v803, 0
        %807 = vmatprep.subr.mxu0 0.0
        %808 = vmatpush1.msra.mxu0 %v696
        %809 = vmatprep.subr.mxu0 0.0
        %810 = vmatpush1.msra.mxu0 0.0
        %811 = vmatprep.subr.mxu0 0.0
        %812 = vmatpush1.msra.mxu0 0.0
        %813 = vmatprep.subr.mxu0 0.0
        %814 = vmatpush1.msra.mxu0 0.0
        %815 = vmatprep.subr.mxu0 0.0
        %816 = vmatpush1.msra.mxu0 0.0
        %817 = vmatprep.subr.mxu0 0.0
        %818 = vmatpush1.msra.mxu0 0.0
        %819 = vmatprep.subr.mxu0 0.0
        %820 = vmatpush1.msra.mxu0 0.0
        %821 = vmatprep.subr.mxu0 0.0
        %822 = vmatpush1.msra.mxu0 0.0
        %823 = vmatprep.subr.mxu0 0.0
        %824 = vmatpush1.msra.mxu0 0.0
        %825 = vmatprep.subr.mxu0 0.0
        %826 = vmatpush1.msra.mxu0 0.0
        %827 = vmatprep.subr.mxu0 0.0
        %828 = vmatpush1.msra.mxu0 0.0
        %829 = vmatprep.subr.mxu0 0.0
        %830 = vmatpush1.msra.mxu0 0.0
        %831 = vmatprep.subr.mxu0 0.0
        %832 = vmatpush1.msra.mxu0 0.0
        %833 = vmatprep.subr.mxu0 0.0
        %834 = vmatpush1.msra.mxu0 0.0
        %835 = vmatprep.subr.mxu0 0.0
        %836 = vmatpush1.msra.mxu0 0.0
        %837 = vmatprep.subr.mxu0 0.0
        %838 = vmatpush1.msra.mxu0 0.0
        %839 = vmatprep.subr.mxu0 0.0
        %840 = vmatpush1.msra.mxu0 0.0
        %841 = vmatprep.subr.mxu0 0.0
        %842 = vmatpush1.msra.mxu0 0.0
        %843 = vmatprep.subr.mxu0 0.0
        %844 = vmatpush1.msra.mxu0 0.0
        %845 = vmatprep.subr.mxu0 0.0
        %846 = vmatpush1.msra.mxu0 0.0
        %847 = vmatprep.subr.mxu0 0.0
        %848 = vmatpush1.msra.mxu0 0.0
        %849 = vmatprep.subr.mxu0 0.0
        %850 = vmatpush1.msra.mxu0 0.0
        %851 = vmatprep.subr.mxu0 0.0
        %852 = vmatpush1.msra.mxu0 0.0
        %853 = vmatprep.subr.mxu0 0.0
        %854 = vmatpush1.msra.mxu0 0.0
        %855 = vmatprep.subr.mxu0 0.0
        %856 = vmatpush1.msra.mxu0 0.0
        %857 = vmatprep.subr.mxu0 0.0
        %858 = vmatpush1.msra.mxu0 0.0
        %859 = vmatprep.subr.mxu0 0.0
        %860 = vmatpush1.msra.mxu0 0.0
        %861 = vmatprep.subr.mxu0 0.0
        %862 = vmatpush1.msra.mxu0 0.0
        %863 = vmatprep.subr.mxu0 0.0
        %864 = vmatpush1.msra.mxu0 0.0
        %865 = vmatprep.subr.mxu0 0.0
        %866 = vmatpush1.msra.mxu0 0.0
        %867 = vmatprep.subr.mxu0 0.0
        %868 = vmatpush1.msra.mxu0 0.0
        %869 = vmatprep.subr.mxu0 0.0
        %870 = vmatpush1.msra.mxu0 0.0
        %871 = vmatprep.mubr.f32.mxu0 0.0
        %872 = vmatmul.mubr.f32.gmra.mrb[0].mxu0 %v805
        %v873 = vpop.f32.mrb[0].mxu0
        %v874 = vadd.f32 0.0, %v873
        %v875 = vpop.f32.mrb[0].mxu0
        %876 = vdwg.mxu0
        %877 = vrot.lane.b32.xlu0 %v542, 120
        %v878 = vpop.permute.xlu0 %877
        %879 = vrot.lane.b32.xlu0 %v619, 120
        %v880 = vpop.permute.xlu0 %879
        %v881 = vsel %vm710, %v878, 0
        %v883 = vsel %vm710, %v880, 0
        %885 = vmatprep.subr.mxu0 0.0
        %886 = vmatpush1.xpose.msra.mxu0 %v883
        %887 = vmatprep.subr.mxu0 0.0
        %888 = vmatpush1.xpose.msra.mxu0 0.0
        %889 = vmatprep.subr.mxu0 0.0
        %890 = vmatpush1.xpose.msra.mxu0 0.0
        %891 = vmatprep.subr.mxu0 0.0
        %892 = vmatpush1.xpose.msra.mxu0 0.0
        %893 = vmatprep.subr.mxu0 0.0
        %894 = vmatpush1.xpose.msra.mxu0 0.0
        %895 = vmatprep.subr.mxu0 0.0
        %896 = vmatpush1.xpose.msra.mxu0 0.0
        %897 = vmatprep.subr.mxu0 0.0
        %898 = vmatpush1.xpose.msra.mxu0 0.0
        %899 = vmatprep.subr.mxu0 0.0
        %900 = vmatpush1.xpose.msra.mxu0 0.0
        %901 = vmatprep.subr.mxu0 0.0
        %902 = vmatpush1.xpose.msra.mxu0 0.0
        %903 = vmatprep.subr.mxu0 0.0
        %904 = vmatpush1.xpose.msra.mxu0 0.0
        %905 = vmatprep.subr.mxu0 0.0
        %906 = vmatpush1.xpose.msra.mxu0 0.0
        %907 = vmatprep.subr.mxu0 0.0
        %908 = vmatpush1.xpose.msra.mxu0 0.0
        %909 = vmatprep.subr.mxu0 0.0
        %910 = vmatpush1.xpose.msra.mxu0 0.0
        %911 = vmatprep.subr.mxu0 0.0
        %912 = vmatpush1.xpose.msra.mxu0 0.0
        %913 = vmatprep.subr.mxu0 0.0
        %914 = vmatpush1.xpose.msra.mxu0 0.0
        %915 = vmatprep.subr.mxu0 0.0
        %916 = vmatpush1.xpose.msra.mxu0 0.0
        %917 = vmatprep.subr.mxu0 0.0
        %918 = vmatpush1.xpose.msra.mxu0 0.0
        %919 = vmatprep.subr.mxu0 0.0
        %920 = vmatpush1.xpose.msra.mxu0 0.0
        %921 = vmatprep.subr.mxu0 0.0
        %922 = vmatpush1.xpose.msra.mxu0 0.0
        %923 = vmatprep.subr.mxu0 0.0
        %924 = vmatpush1.xpose.msra.mxu0 0.0
        %925 = vmatprep.subr.mxu0 0.0
        %926 = vmatpush1.xpose.msra.mxu0 0.0
        %927 = vmatprep.subr.mxu0 0.0
        %928 = vmatpush1.xpose.msra.mxu0 0.0
        %929 = vmatprep.subr.mxu0 0.0
        %930 = vmatpush1.xpose.msra.mxu0 0.0
        %931 = vmatprep.subr.mxu0 0.0
        %932 = vmatpush1.xpose.msra.mxu0 0.0
        %933 = vmatprep.subr.mxu0 0.0
        %934 = vmatpush1.xpose.msra.mxu0 0.0
        %935 = vmatprep.subr.mxu0 0.0
        %936 = vmatpush1.xpose.msra.mxu0 0.0
        %937 = vmatprep.subr.mxu0 0.0
        %938 = vmatpush1.xpose.msra.mxu0 0.0
        %939 = vmatprep.subr.mxu0 0.0
        %940 = vmatpush1.xpose.msra.mxu0 0.0
        %941 = vmatprep.subr.mxu0 0.0
        %942 = vmatpush1.xpose.msra.mxu0 0.0
        %943 = vmatprep.subr.mxu0 0.0
        %944 = vmatpush1.xpose.msra.mxu0 0.0
        %945 = vmatprep.subr.mxu0 0.0
        %946 = vmatpush1.xpose.msra.mxu0 0.0
        %947 = vmatprep.subr.mxu0 0.0
        %948 = vmatpush1.xpose.msra.mxu0 0.0
        %949 = vmatprep.mubr.f32.mxu0 0.0
        %950 = vmatmul.mubr.f32.gmra.mrb[0].mxu0 %v881
        %v951 = vpop.f32.mrb[0].mxu0
        %v952 = vadd.f32 0.0, %v951
        %v953 = vpop.f32.mrb[0].mxu0
        %954 = vdwg.mxu0
        %v955 = vsel %vm788, %v952, -1000000.0
        %v956 = vsel %vm710, %v955, -inf
        %957 = vmax.xlane.f32.xlu0 %v956
        %v958 = vpop.xlane.xlu0 %957
        %v959 = vsub.f32 %v955, %v958
        %v960 = vmul.f32 %v959, 1.442695
        %v961 = vpow.pop %v960
        %v962 = vsel %vm710, %v961, 0.0
        %963 = vadd.xlane.f32.xlu0 %v962
        %v964 = vpop.xlane.xlu0 %963
        %v965 = vrcp.pop %v964
        %v966 = vmul.f32 %v964, %v965
        %v967 = vsub.f32 2.0, %v966
        %v968 = vmul.f32 %v965, %v967
        %v969 = vmul.f32 %v961, %v968
        %971 = vrot.lane.b32.xlu0 %v696, 120
        %v972 = vpop.permute.xlu0 %971
        %v975 = vsel %vm710, %v969, 0
        %977 = vmatprep.subr.mxu0 0.0
        %978 = vmatpush1.msra.mxu0 %v972
        %979 = vmatprep.subr.mxu0 0.0
        %980 = vmatpush1.msra.mxu0 0.0
        %981 = vmatprep.subr.mxu0 0.0
        %982 = vmatpush1.msra.mxu0 0.0
        %983 = vmatprep.subr.mxu0 0.0
        %984 = vmatpush1.msra.mxu0 0.0
        %985 = vmatprep.subr.mxu0 0.0
        %986 = vmatpush1.msra.mxu0 0.0
        %987 = vmatprep.subr.mxu0 0.0
        %988 = vmatpush1.msra.mxu0 0.0
        %989 = vmatprep.subr.mxu0 0.0
        %990 = vmatpush1.msra.mxu0 0.0
        %991 = vmatprep.subr.mxu0 0.0
        %992 = vmatpush1.msra.mxu0 0.0
        %993 = vmatprep.subr.mxu0 0.0
        %994 = vmatpush1.msra.mxu0 0.0
        %995 = vmatprep.subr.mxu0 0.0
        %996 = vmatpush1.msra.mxu0 0.0
        %997 = vmatprep.subr.mxu0 0.0
        %998 = vmatpush1.msra.mxu0 0.0
        %999 = vmatprep.subr.mxu0 0.0
        %1000 = vmatpush1.msra.mxu0 0.0
        %1001 = vmatprep.subr.mxu0 0.0
        %1002 = vmatpush1.msra.mxu0 0.0
        %1003 = vmatprep.subr.mxu0 0.0
        %1004 = vmatpush1.msra.mxu0 0.0
        %1005 = vmatprep.subr.mxu0 0.0
        %1006 = vmatpush1.msra.mxu0 0.0
        %1007 = vmatprep.subr.mxu0 0.0
        %1008 = vmatpush1.msra.mxu0 0.0
        %1009 = vmatprep.subr.mxu0 0.0
        %1010 = vmatpush1.msra.mxu0 0.0
        %1011 = vmatprep.subr.mxu0 0.0
        %1012 = vmatpush1.msra.mxu0 0.0
        %1013 = vmatprep.subr.mxu0 0.0
        %1014 = vmatpush1.msra.mxu0 0.0
        %1015 = vmatprep.subr.mxu0 0.0
        %1016 = vmatpush1.msra.mxu0 0.0
        %1017 = vmatprep.subr.mxu0 0.0
        %1018 = vmatpush1.msra.mxu0 0.0
        %1019 = vmatprep.subr.mxu0 0.0
        %1020 = vmatpush1.msra.mxu0 0.0
        %1021 = vmatprep.subr.mxu0 0.0
        %1022 = vmatpush1.msra.mxu0 0.0
        %1023 = vmatprep.subr.mxu0 0.0
        %1024 = vmatpush1.msra.mxu0 0.0
        %1025 = vmatprep.subr.mxu0 0.0
        %1026 = vmatpush1.msra.mxu0 0.0
        %1027 = vmatprep.subr.mxu0 0.0
        %1028 = vmatpush1.msra.mxu0 0.0
        %1029 = vmatprep.subr.mxu0 0.0
        %1030 = vmatpush1.msra.mxu0 0.0
        %1031 = vmatprep.subr.mxu0 0.0
        %1032 = vmatpush1.msra.mxu0 0.0
        %1033 = vmatprep.subr.mxu0 0.0
        %1034 = vmatpush1.msra.mxu0 0.0
        %1035 = vmatprep.subr.mxu0 0.0
        %1036 = vmatpush1.msra.mxu0 0.0
        %1037 = vmatprep.subr.mxu0 0.0
        %1038 = vmatpush1.msra.mxu0 0.0
        %1039 = vmatprep.subr.mxu0 0.0
        %1040 = vmatpush1.msra.mxu0 0.0
        %1041 = vmatprep.mubr.f32.mxu0 0.0
        %1042 = vmatmul.mubr.f32.gmra.mrb[0].mxu0 %v975
        %v1043 = vpop.f32.mrb[0].mxu0
        %v1044 = vadd.f32 0.0, %v1043
        %v1045 = vpop.f32.mrb[0].mxu0
        %1046 = vdwg.mxu0
        %1047 = vrot.lane.b32.xlu0 %v542, 112
        %v1048 = vpop.permute.xlu0 %1047
        %1049 = vrot.lane.b32.xlu0 %v619, 112
        %v1050 = vpop.permute.xlu0 %1049
        %v1051 = vsel %vm710, %v1048, 0
        %v1053 = vsel %vm710, %v1050, 0
        %1055 = vmatprep.subr.mxu0 0.0
        %1056 = vmatpush1.xpose.msra.mxu0 %v1053
        %1057 = vmatprep.subr.mxu0 0.0
        %1058 = vmatpush1.xpose.msra.mxu0 0.0
        %1059 = vmatprep.subr.mxu0 0.0
        %1060 = vmatpush1.xpose.msra.mxu0 0.0
        %1061 = vmatprep.subr.mxu0 0.0
        %1062 = vmatpush1.xpose.msra.mxu0 0.0
        %1063 = vmatprep.subr.mxu0 0.0
        %1064 = vmatpush1.xpose.msra.mxu0 0.0
        %1065 = vmatprep.subr.mxu0 0.0
        %1066 = vmatpush1.xpose.msra.mxu0 0.0
        %1067 = vmatprep.subr.mxu0 0.0
        %1068 = vmatpush1.xpose.msra.mxu0 0.0
        %1069 = vmatprep.subr.mxu0 0.0
        %1070 = vmatpush1.xpose.msra.mxu0 0.0
        %1071 = vmatprep.subr.mxu0 0.0
        %1072 = vmatpush1.xpose.msra.mxu0 0.0
        %1073 = vmatprep.subr.mxu0 0.0
        %1074 = vmatpush1.xpose.msra.mxu0 0.0
        %1075 = vmatprep.subr.mxu0 0.0
        %1076 = vmatpush1.xpose.msra.mxu0 0.0
        %1077 = vmatprep.subr.mxu0 0.0
        %1078 = vmatpush1.xpose.msra.mxu0 0.0
        %1079 = vmatprep.subr.mxu0 0.0
        %1080 = vmatpush1.xpose.msra.mxu0 0.0
        %1081 = vmatprep.subr.mxu0 0.0
        %1082 = vmatpush1.xpose.msra.mxu0 0.0
        %1083 = vmatprep.subr.mxu0 0.0
        %1084 = vmatpush1.xpose.msra.mxu0 0.0
        %1085 = vmatprep.subr.mxu0 0.0
        %1086 = vmatpush1.xpose.msra.mxu0 0.0
        %1087 = vmatprep.subr.mxu0 0.0
        %1088 = vmatpush1.xpose.msra.mxu0 0.0
        %1089 = vmatprep.subr.mxu0 0.0
        %1090 = vmatpush1.xpose.msra.mxu0 0.0
        %1091 = vmatprep.subr.mxu0 0.0
        %1092 = vmatpush1.xpose.msra.mxu0 0.0
        %1093 = vmatprep.subr.mxu0 0.0
        %1094 = vmatpush1.xpose.msra.mxu0 0.0
        %1095 = vmatprep.subr.mxu0 0.0
        %1096 = vmatpush1.xpose.msra.mxu0 0.0
        %1097 = vmatprep.subr.mxu0 0.0
        %1098 = vmatpush1.xpose.msra.mxu0 0.0
        %1099 = vmatprep.subr.mxu0 0.0
        %1100 = vmatpush1.xpose.msra.mxu0 0.0
        %1101 = vmatprep.subr.mxu0 0.0
        %1102 = vmatpush1.xpose.msra.mxu0 0.0
        %1103 = vmatprep.subr.mxu0 0.0
        %1104 = vmatpush1.xpose.msra.mxu0 0.0
        %1105 = vmatprep.subr.mxu0 0.0
        %1106 = vmatpush1.xpose.msra.mxu0 0.0
        %1107 = vmatprep.subr.mxu0 0.0
        %1108 = vmatpush1.xpose.msra.mxu0 0.0
        %1109 = vmatprep.subr.mxu0 0.0
        %1110 = vmatpush1.xpose.msra.mxu0 0.0
        %1111 = vmatprep.subr.mxu0 0.0
        %1112 = vmatpush1.xpose.msra.mxu0 0.0
        %1113 = vmatprep.subr.mxu0 0.0
        %1114 = vmatpush1.xpose.msra.mxu0 0.0
        %1115 = vmatprep.subr.mxu0 0.0
        %1116 = vmatpush1.xpose.msra.mxu0 0.0
        %1117 = vmatprep.subr.mxu0 0.0
        %1118 = vmatpush1.xpose.msra.mxu0 0.0
        %1119 = vmatprep.mubr.f32.mxu0 0.0
        %1120 = vmatmul.mubr.f32.gmra.mrb[0].mxu0 %v1051
        %v1121 = vpop.f32.mrb[0].mxu0
        %v1122 = vadd.f32 0.0, %v1121
        %v1123 = vpop.f32.mrb[0].mxu0
        %1124 = vdwg.mxu0
        %v1125 = vsel %vm788, %v1122, -1000000.0
        %v1126 = vsel %vm710, %v1125, -inf
        %1127 = vmax.xlane.f32.xlu0 %v1126
        %v1128 = vpop.xlane.xlu0 %1127
        %v1129 = vsub.f32 %v1125, %v1128
        %v1130 = vmul.f32 %v1129, 1.442695
        %v1131 = vpow.pop %v1130
        %v1132 = vsel %vm710, %v1131, 0.0
        %1133 = vadd.xlane.f32.xlu0 %v1132
        %v1134 = vpop.xlane.xlu0 %1133
        %v1135 = vrcp.pop %v1134
        %v1136 = vmul.f32 %v1134, %v1135
        %v1137 = vsub.f32 2.0, %v1136
        %v1138 = vmul.f32 %v1135, %v1137
        %v1139 = vmul.f32 %v1131, %v1138
        %1140 = vrot.lane.b32.xlu0 %v696, 112
        %v1141 = vpop.permute.xlu0 %1140
        %v1144 = vsel %vm710, %v1139, 0
        %1146 = vmatprep.subr.mxu0 0.0
        %1147 = vmatpush1.msra.mxu0 %v1141
        %1148 = vmatprep.subr.mxu0 0.0
        %1149 = vmatpush1.msra.mxu0 0.0
        %1150 = vmatprep.subr.mxu0 0.0
        %1151 = vmatpush1.msra.mxu0 0.0
        %1152 = vmatprep.subr.mxu0 0.0
        %1153 = vmatpush1.msra.mxu0 0.0
        %1154 = vmatprep.subr.mxu0 0.0
        %1155 = vmatpush1.msra.mxu0 0.0
        %1156 = vmatprep.subr.mxu0 0.0
        %1157 = vmatpush1.msra.mxu0 0.0
        %1158 = vmatprep.subr.mxu0 0.0
        %1159 = vmatpush1.msra.mxu0 0.0
        %1160 = vmatprep.subr.mxu0 0.0
        %1161 = vmatpush1.msra.mxu0 0.0
        %1162 = vmatprep.subr.mxu0 0.0
        %1163 = vmatpush1.msra.mxu0 0.0
        %1164 = vmatprep.subr.mxu0 0.0
        %1165 = vmatpush1.msra.mxu0 0.0
        %1166 = vmatprep.subr.mxu0 0.0
        %1167 = vmatpush1.msra.mxu0 0.0
        %1168 = vmatprep.subr.mxu0 0.0
        %1169 = vmatpush1.msra.mxu0 0.0
        %1170 = vmatprep.subr.mxu0 0.0
        %1171 = vmatpush1.msra.mxu0 0.0
        %1172 = vmatprep.subr.mxu0 0.0
        %1173 = vmatpush1.msra.mxu0 0.0
        %1174 = vmatprep.subr.mxu0 0.0
        %1175 = vmatpush1.msra.mxu0 0.0
        %1176 = vmatprep.subr.mxu0 0.0
        %1177 = vmatpush1.msra.mxu0 0.0
        %1178 = vmatprep.subr.mxu0 0.0
        %1179 = vmatpush1.msra.mxu0 0.0
        %1180 = vmatprep.subr.mxu0 0.0
        %1181 = vmatpush1.msra.mxu0 0.0
        %1182 = vmatprep.subr.mxu0 0.0
        %1183 = vmatpush1.msra.mxu0 0.0
        %1184 = vmatprep.subr.mxu0 0.0
        %1185 = vmatpush1.msra.mxu0 0.0
        %1186 = vmatprep.subr.mxu0 0.0
        %1187 = vmatpush1.msra.mxu0 0.0
        %1188 = vmatprep.subr.mxu0 0.0
        %1189 = vmatpush1.msra.mxu0 0.0
        %1190 = vmatprep.subr.mxu0 0.0
        %1191 = vmatpush1.msra.mxu0 0.0
        %1192 = vmatprep.subr.mxu0 0.0
        %1193 = vmatpush1.msra.mxu0 0.0
        %1194 = vmatprep.subr.mxu0 0.0
        %1195 = vmatpush1.msra.mxu0 0.0
        %1196 = vmatprep.subr.mxu0 0.0
        %1197 = vmatpush1.msra.mxu0 0.0
        %1198 = vmatprep.subr.mxu0 0.0
        %1199 = vmatpush1.msra.mxu0 0.0
        %1200 = vmatprep.subr.mxu0 0.0
        %1201 = vmatpush1.msra.mxu0 0.0
        %1202 = vmatprep.subr.mxu0 0.0
        %1203 = vmatpush1.msra.mxu0 0.0
        %1204 = vmatprep.subr.mxu0 0.0
        %1205 = vmatpush1.msra.mxu0 0.0
        %1206 = vmatprep.subr.mxu0 0.0
        %1207 = vmatpush1.msra.mxu0 0.0
        %1208 = vmatprep.subr.mxu0 0.0
        %1209 = vmatpush1.msra.mxu0 0.0
        %1210 = vmatprep.mubr.f32.mxu0 0.0
        %1211 = vmatmul.mubr.f32.gmra.mrb[0].mxu0 %v1144
        %v1212 = vpop.f32.mrb[0].mxu0
        %v1213 = vadd.f32 0.0, %v1212
        %v1214 = vpop.f32.mrb[0].mxu0
        %1215 = vdwg.mxu0
        %1216 = vrot.lane.b32.xlu0 %v542, 104
        %v1217 = vpop.permute.xlu0 %1216
        %1218 = vrot.lane.b32.xlu0 %v619, 104
        %v1219 = vpop.permute.xlu0 %1218
        %v1220 = vsel %vm710, %v1217, 0
        %v1222 = vsel %vm710, %v1219, 0
        %1224 = vmatprep.subr.mxu0 0.0
        %1225 = vmatpush1.xpose.msra.mxu0 %v1222
        %1226 = vmatprep.subr.mxu0 0.0
        %1227 = vmatpush1.xpose.msra.mxu0 0.0
        %1228 = vmatprep.subr.mxu0 0.0
        %1229 = vmatpush1.xpose.msra.mxu0 0.0
        %1230 = vmatprep.subr.mxu0 0.0
        %1231 = vmatpush1.xpose.msra.mxu0 0.0
        %1232 = vmatprep.subr.mxu0 0.0
        %1233 = vmatpush1.xpose.msra.mxu0 0.0
        %1234 = vmatprep.subr.mxu0 0.0
        %1235 = vmatpush1.xpose.msra.mxu0 0.0
        %1236 = vmatprep.subr.mxu0 0.0
        %1237 = vmatpush1.xpose.msra.mxu0 0.0
        %1238 = vmatprep.subr.mxu0 0.0
        %1239 = vmatpush1.xpose.msra.mxu0 0.0
        %1240 = vmatprep.subr.mxu0 0.0
        %1241 = vmatpush1.xpose.msra.mxu0 0.0
        %1242 = vmatprep.subr.mxu0 0.0
        %1243 = vmatpush1.xpose.msra.mxu0 0.0
        %1244 = vmatprep.subr.mxu0 0.0
        %1245 = vmatpush1.xpose.msra.mxu0 0.0
        %1246 = vmatprep.subr.mxu0 0.0
        %1247 = vmatpush1.xpose.msra.mxu0 0.0
        %1248 = vmatprep.subr.mxu0 0.0
        %1249 = vmatpush1.xpose.msra.mxu0 0.0
        %1250 = vmatprep.subr.mxu0 0.0
        %1251 = vmatpush1.xpose.msra.mxu0 0.0
        %1252 = vmatprep.subr.mxu0 0.0
        %1253 = vmatpush1.xpose.msra.mxu0 0.0
        %1254 = vmatprep.subr.mxu0 0.0
        %1255 = vmatpush1.xpose.msra.mxu0 0.0
        %1256 = vmatprep.subr.mxu0 0.0
        %1257 = vmatpush1.xpose.msra.mxu0 0.0
        %1258 = vmatprep.subr.mxu0 0.0
        %1259 = vmatpush1.xpose.msra.mxu0 0.0
        %1260 = vmatprep.subr.mxu0 0.0
        %1261 = vmatpush1.xpose.msra.mxu0 0.0
        %1262 = vmatprep.subr.mxu0 0.0
        %1263 = vmatpush1.xpose.msra.mxu0 0.0
        %1264 = vmatprep.subr.mxu0 0.0
        %1265 = vmatpush1.xpose.msra.mxu0 0.0
        %1266 = vmatprep.subr.mxu0 0.0
        %1267 = vmatpush1.xpose.msra.mxu0 0.0
        %1268 = vmatprep.subr.mxu0 0.0
        %1269 = vmatpush1.xpose.msra.mxu0 0.0
        %1270 = vmatprep.subr.mxu0 0.0
        %1271 = vmatpush1.xpose.msra.mxu0 0.0
        %1272 = vmatprep.subr.mxu0 0.0
        %1273 = vmatpush1.xpose.msra.mxu0 0.0
        %1274 = vmatprep.subr.mxu0 0.0
        %1275 = vmatpush1.xpose.msra.mxu0 0.0
        %1276 = vmatprep.subr.mxu0 0.0
        %1277 = vmatpush1.xpose.msra.mxu0 0.0
        %1278 = vmatprep.subr.mxu0 0.0
        %1279 = vmatpush1.xpose.msra.mxu0 0.0
        %1280 = vmatprep.subr.mxu0 0.0
        %1281 = vmatpush1.xpose.msra.mxu0 0.0
        %1282 = vmatprep.subr.mxu0 0.0
        %1283 = vmatpush1.xpose.msra.mxu0 0.0
        %1284 = vmatprep.subr.mxu0 0.0
        %1285 = vmatpush1.xpose.msra.mxu0 0.0
        %1286 = vmatprep.subr.mxu0 0.0
        %1287 = vmatpush1.xpose.msra.mxu0 0.0
        %1288 = vmatprep.mubr.f32.mxu0 0.0
        %1289 = vmatmul.mubr.f32.gmra.mrb[0].mxu0 %v1220
        %v1290 = vpop.f32.mrb[0].mxu0
        %v1291 = vadd.f32 0.0, %v1290
        %v1292 = vpop.f32.mrb[0].mxu0
        %1293 = vdwg.mxu0
        %v1294 = vsel %vm788, %v1291, -1000000.0
        %v1295 = vsel %vm710, %v1294, -inf
        %1296 = vmax.xlane.f32.xlu0 %v1295
        %v1297 = vpop.xlane.xlu0 %1296
        %v1298 = vsub.f32 %v1294, %v1297
        %v1299 = vmul.f32 %v1298, 1.442695
        %v1300 = vpow.pop %v1299
        %v1301 = vsel %vm710, %v1300, 0.0
        %1302 = vadd.xlane.f32.xlu0 %v1301
        %v1303 = vpop.xlane.xlu0 %1302
        %v1304 = vrcp.pop %v1303
        %v1305 = vmul.f32 %v1303, %v1304
        %v1306 = vsub.f32 2.0, %v1305
        %v1307 = vmul.f32 %v1304, %v1306
        %v1308 = vmul.f32 %v1300, %v1307
        %1309 = vrot.lane.b32.xlu0 %v696, 104
        %v1310 = vpop.permute.xlu0 %1309
        %v1313 = vsel %vm710, %v1308, 0
        %1315 = vmatprep.subr.mxu0 0.0
        %1316 = vmatpush1.msra.mxu0 %v1310
        %1317 = vmatprep.subr.mxu0 0.0
        %1318 = vmatpush1.msra.mxu0 0.0
        %1319 = vmatprep.subr.mxu0 0.0
        %1320 = vmatpush1.msra.mxu0 0.0
        %1321 = vmatprep.subr.mxu0 0.0
        %1322 = vmatpush1.msra.mxu0 0.0
        %1323 = vmatprep.subr.mxu0 0.0
        %1324 = vmatpush1.msra.mxu0 0.0
        %1325 = vmatprep.subr.mxu0 0.0
        %1326 = vmatpush1.msra.mxu0 0.0
        %1327 = vmatprep.subr.mxu0 0.0
        %1328 = vmatpush1.msra.mxu0 0.0
        %1329 = vmatprep.subr.mxu0 0.0
        %1330 = vmatpush1.msra.mxu0 0.0
        %1331 = vmatprep.subr.mxu0 0.0
        %1332 = vmatpush1.msra.mxu0 0.0
        %1333 = vmatprep.subr.mxu0 0.0
        %1334 = vmatpush1.msra.mxu0 0.0
        %1335 = vmatprep.subr.mxu0 0.0
        %1336 = vmatpush1.msra.mxu0 0.0
        %1337 = vmatprep.subr.mxu0 0.0
        %1338 = vmatpush1.msra.mxu0 0.0
        %1339 = vmatprep.subr.mxu0 0.0
        %1340 = vmatpush1.msra.mxu0 0.0
        %1341 = vmatprep.subr.mxu0 0.0
        %1342 = vmatpush1.msra.mxu0 0.0
        %1343 = vmatprep.subr.mxu0 0.0
        %1344 = vmatpush1.msra.mxu0 0.0
        %1345 = vmatprep.subr.mxu0 0.0
        %1346 = vmatpush1.msra.mxu0 0.0
        %1347 = vmatprep.subr.mxu0 0.0
        %1348 = vmatpush1.msra.mxu0 0.0
        %1349 = vmatprep.subr.mxu0 0.0
        %1350 = vmatpush1.msra.mxu0 0.0
        %1351 = vmatprep.subr.mxu0 0.0
        %1352 = vmatpush1.msra.mxu0 0.0
        %1353 = vmatprep.subr.mxu0 0.0
        %1354 = vmatpush1.msra.mxu0 0.0
        %1355 = vmatprep.subr.mxu0 0.0
        %1356 = vmatpush1.msra.mxu0 0.0
        %1357 = vmatprep.subr.mxu0 0.0
        %1358 = vmatpush1.msra.mxu0 0.0
        %1359 = vmatprep.subr.mxu0 0.0
        %1360 = vmatpush1.msra.mxu0 0.0
        %1361 = vmatprep.subr.mxu0 0.0
        %1362 = vmatpush1.msra.mxu0 0.0
        %1363 = vmatprep.subr.mxu0 0.0
        %1364 = vmatpush1.msra.mxu0 0.0
        %1365 = vmatprep.subr.mxu0 0.0
        %1366 = vmatpush1.msra.mxu0 0.0
        %1367 = vmatprep.subr.mxu0 0.0
        %1368 = vmatpush1.msra.mxu0 0.0
        %1369 = vmatprep.subr.mxu0 0.0
        %1370 = vmatpush1.msra.mxu0 0.0
        %1371 = vmatprep.subr.mxu0 0.0
        %1372 = vmatpush1.msra.mxu0 0.0
        %1373 = vmatprep.subr.mxu0 0.0
        %1374 = vmatpush1.msra.mxu0 0.0
        %1375 = vmatprep.subr.mxu0 0.0
        %1376 = vmatpush1.msra.mxu0 0.0
        %1377 = vmatprep.subr.mxu0 0.0
        %1378 = vmatpush1.msra.mxu0 0.0
        %1379 = vmatprep.mubr.f32.mxu0 0.0
        %1380 = vmatmul.mubr.f32.gmra.mrb[0].mxu0 %v1313
        %v1381 = vpop.f32.mrb[0].mxu0
        %v1382 = vadd.f32 0.0, %v1381
        %v1383 = vpop.f32.mrb[0].mxu0
        %1384 = vdwg.mxu0
        %1386 = vrot.lane.b32.xlu0 %v1044, 8
        %v1387 = vpop.permute.xlu0 %1386
        %1390 = vrot.lane.b32.xlu0 %v1213, 16
        %v1391 = vpop.permute.xlu0 %1390
        %1394 = vrot.lane.b32.xlu0 %v1382, 24
        %v1395 = vpop.permute.xlu0 %1394
        %v1397 = vsel %vm710, %v874, %v1387
        %vm1398 = vcmask 130048
        %v1399 = vsel %vm1398, %v1397, %v1391
        %vm1400 = vcmask 195584
        %v1401 = vsel %vm1400, %v1399, %v1395
        %v1402 = vld [vmem:[#allocation13] sm:$0xff]
        %v1403 = vld [vmem:[#allocation13 + $0x8] sm:$0xff]
        %v1404 = vld [vmem:[#allocation13 + $0x10] sm:$0xff]
        %v1405 = vld [vmem:[#allocation13 + $0x18] sm:$0xff]
        %v1407 = vsel %vm471, %v1401, 0
        %1409 = vmatprep.subr.mxu0 0.0
        %1410 = vmatpush1.msra.mxu0 %v1402
        %1411 = vmatprep.subr.mxu0 0.0
        %1412 = vmatpush1.msra.mxu0 %v1403
        %1413 = vmatprep.subr.mxu0 0.0
        %1414 = vmatpush1.msra.mxu0 %v1404
        %1415 = vmatprep.subr.mxu0 0.0
        %1416 = vmatpush1.msra.mxu0 %v1405
        %1417 = vmatprep.subr.mxu0 0.0
        %1418 = vmatpush1.msra.mxu0 0.0
        %1419 = vmatprep.subr.mxu0 0.0
        %1420 = vmatpush1.msra.mxu0 0.0
        %1421 = vmatprep.subr.mxu0 0.0
        %1422 = vmatpush1.msra.mxu0 0.0
        %1423 = vmatprep.subr.mxu0 0.0
        %1424 = vmatpush1.msra.mxu0 0.0
        %1425 = vmatprep.subr.mxu0 0.0
        %1426 = vmatpush1.msra.mxu0 0.0
        %1427 = vmatprep.subr.mxu0 0.0
        %1428 = vmatpush1.msra.mxu0 0.0
        %1429 = vmatprep.subr.mxu0 0.0
        %1430 = vmatpush1.msra.mxu0 0.0
        %1431 = vmatprep.subr.mxu0 0.0
        %1432 = vmatpush1.msra.mxu0 0.0
        %1433 = vmatprep.subr.mxu0 0.0
        %1434 = vmatpush1.msra.mxu0 0.0
        %1435 = vmatprep.subr.mxu0 0.0
        %1436 = vmatpush1.msra.mxu0 0.0
        %1437 = vmatprep.subr.mxu0 0.0
        %1438 = vmatpush1.msra.mxu0 0.0
        %1439 = vmatprep.subr.mxu0 0.0
        %1440 = vmatpush1.msra.mxu0 0.0
        %1441 = vmatprep.subr.mxu0 0.0
        %1442 = vmatpush1.msra.mxu0 0.0
        %1443 = vmatprep.subr.mxu0 0.0
        %1444 = vmatpush1.msra.mxu0 0.0
        %1445 = vmatprep.subr.mxu0 0.0
        %1446 = vmatpush1.msra.mxu0 0.0
        %1447 = vmatprep.subr.mxu0 0.0
        %1448 = vmatpush1.msra.mxu0 0.0
        %1449 = vmatprep.subr.mxu0 0.0
        %1450 = vmatpush1.msra.mxu0 0.0
        %1451 = vmatprep.subr.mxu0 0.0
        %1452 = vmatpush1.msra.mxu0 0.0
        %1453 = vmatprep.subr.mxu0 0.0
        %1454 = vmatpush1.msra.mxu0 0.0
        %1455 = vmatprep.subr.mxu0 0.0
        %1456 = vmatpush1.msra.mxu0 0.0
        %1457 = vmatprep.subr.mxu0 0.0
        %1458 = vmatpush1.msra.mxu0 0.0
        %1459 = vmatprep.subr.mxu0 0.0
        %1460 = vmatpush1.msra.mxu0 0.0
        %1461 = vmatprep.subr.mxu0 0.0
        %1462 = vmatpush1.msra.mxu0 0.0
        %1463 = vmatprep.subr.mxu0 0.0
        %1464 = vmatpush1.msra.mxu0 0.0
        %1465 = vmatprep.subr.mxu0 0.0
        %1466 = vmatpush1.msra.mxu0 0.0
        %1467 = vmatprep.subr.mxu0 0.0
        %1468 = vmatpush1.msra.mxu0 0.0
        %1469 = vmatprep.subr.mxu0 0.0
        %1470 = vmatpush1.msra.mxu0 0.0
        %1471 = vmatprep.subr.mxu0 0.0
        %1472 = vmatpush1.msra.mxu0 0.0
        %1473 = vmatprep.mubr.f32.mxu0 0.0
        %1474 = vmatmul.mubr.f32.gmra.mrb[0].mxu0 %v1407
        %v1475 = vpop.f32.mrb[0].mxu0
        %v1476 = vadd.f32 0.0, %v1475
        %v1477 = vpop.f32.mrb[0].mxu0
        %1478 = vdwg.mxu0
        %1479 = vst.msk [vmem:[%s460] sm:$0xff] %vm471, %v1476
        %s1480 = sand.u32 %s226, 1
        %s1481 = scalar_lea.sflag [#allocation4], %s1480
        %s1482 = sand.u32 %s226, 1
        %s1483 = smul.addr %s1482, 8
        %s1484 = scalar_lea.vmem [#allocation14], %s1483
        // Predicated region
        $region81: #{tpu_custom_call.1} parent=51 // pred_check
          %p1485 = pneg %p236
        $region82: #{tpu_custom_call.1} parent=51 // pred_check_branch
          %1487 = sbr.rel (%p1485) target = $region84
        $region83: #{tpu_custom_call.1} parent=51 // pred_region
          %s1489 = ssub.s32 128, 128
          %1490 = vsyncadd %s1481, %s1489
          %s1491 = smul.addr %s30, 128
          %s1492 = scalar_lea.hbm %s8, %s1491
          %s1494 = sshll.u32 %s1484, 4
          %s1495 = int_to_ptr.vmem [resolvable:$true] %s1494
          %1497 = dma.vmem_to_hbm [thread:$0]  %s1495, 128, %s1492, %s1481
        $region84: #{tpu_custom_call.1} parent=51 // pred_fallthru
          _
      $region52: #{tpu_custom_call.1} parent=5 // pred_fallthru
        _
      %p1498 = scmp.le.s32.totalorder 2, %s25
      // Predicated region
      $region85: #{tpu_custom_call.1} parent=5 // pred_check
        %p1499 = pneg %p1498
      $region86: #{tpu_custom_call.1} parent=5 // pred_check_branch
        %1501 = sbr.rel (%p1499) target = $region88
      $region87: #{tpu_custom_call.1} parent=5 // pred_region
        %s1502 = ssub.s32 %s25, 2
        // Predicated region
        $region89: #{tpu_custom_call.1} parent=87 // pred_check
          %p1503 = pneg %p242
        $region90: #{tpu_custom_call.1} parent=87 // pred_check_branch
          %1505 = sbr.rel (%p1503) target = $region92
        $region91: #{tpu_custom_call.1} parent=87 // pred_region
          %s1506 = sand.u32 %s227, 1
          %s1507 = scalar_lea.sflag [#allocation4], %s1506
          %s1508 = sand.u32 %s227, 1
          %s1509 = smul.addr %s1508, 8
          %s1510 = scalar_lea.vmem [#allocation14], %s1509
          %1511 = dma.done %s1507, 128
        $region92: #{tpu_custom_call.1} parent=87 // pred_fallthru
          _
      $region88: #{tpu_custom_call.1} parent=5 // pred_fallthru
        _
    $region6: #{tpu_custom_call.1} parent=1 // loop_footer
      %s29 = sadd.s32 1, %s25
    $region7: #{tpu_custom_call.1} parent=1 // loop_footer_branch
      %24 = sbr.rel target = $region3
    $region8: #{tpu_custom_call.1} parent=1 // loop_exit
      _
    %1512 = vsyncpa [#allocation3], 1
    %s1513 = scalar_lea.sflag [#allocation3], 1
    %1514 = vsyncpa %s1513, 1
    %1515 = vsyncpa [#allocation6], 1
    %s1516 = scalar_lea.sflag [#allocation6], 1
    %1517 = vsyncpa %s1516, 1
    %1518 = vsyncpa [#allocation9], 1
    %1519 = vsyncpa [#allocation12], 1
    %1520 = vsyncpa [#allocation4], 1
    %s1521 = scalar_lea.sflag [#allocation4], 1
    %1522 = vsyncpa %s1521, 1

</llo_original>
